<compile_context>
chip_gen: v7x
topology: tpu7x:2x2x1
jax: 0.10.0
libtpu: 0.0.40
codegen_flags: <defaults>
</compile_context>

<pallas_src>
import functools

import jax
import jax.numpy as jnp
from jax.experimental import pallas as pl
from jax.experimental.pallas import tpu as pltpu

N_CLASSES = 19
AVG_DEPTH = 2.7729
LANE = 128
SUBL = 16  # sublane multiple that is safe for both f32 and packed bf16 tiles

IMAGENET_MEAN = jnp.array([[0.485, 0.456, 0.406]], dtype=jnp.float32)  # (1, 3)
IMAGENET_STD = jnp.array([[0.229, 0.224, 0.225]], dtype=jnp.float32)   # (1, 3)


def _round_up(a, b):
    return (a + b - 1) // b * b


# ----------------------------------------------------------------------------
# Kernel 1: synthetic face-parsing head (channel-planar, pure VPU).
#   logits_c = x0*w[0,c] + x1*w[1,c] + x2*w[2,c] + b[c]   (weights pre-folded
#   with the (x+1)/2 + ImageNet normalization), and
#   (argmax != 0)  <=>  max_{c>=1} logit_c > logit_0   (first-occurrence ties).
# ----------------------------------------------------------------------------
def _seg_mask_kernel(x_ref, w_ref, b_ref, mask_ref):
    x = x_ref[...]                       # (1, 3, TR, 128) f32
    x0 = x[0, 0]                         # (TR, 128)
    x1 = x[0, 1]
    x2 = x[0, 2]

    def logit(cls):
        return (x0 * w_ref[0, cls] + x1 * w_ref[1, cls]
                + x2 * w_ref[2, cls] + b_ref[0, cls])

    bg = logit(0)                        # background logit
    best = logit(1)                      # running max over foreground classes
    for cls in range(2, N_CLASSES):
        best = jnp.maximum(best, logit(cls))

    # bf16 is exact for {0.0, 1.0}; halves HBM writeback + downstream reads.
    mask_ref[...] = (best > bg).astype(jnp.bfloat16)[None]   # (1, TR, 128)


def seg_mask(x_nchw, w, b, tile_rows=512):
    """x_nchw: (N, 3, Hs, Ws) in [-1, 1]. Returns bf16 mask (N, Hs, Ws)."""
    n, c, hs, ws = x_nchw.shape
    assert c == 3
    hw = hs * ws
    rows = pl.cdiv(hw, LANE)
    tr = min(tile_rows, _round_up(rows, SUBL))       # multiple of 16
    rows_pad = _round_up(rows, tr)
    hw_pad = rows_pad * LANE

    # Fold (x+1)*0.5 and ImageNet mean/std into the 1x1-conv weights/bias:
    #   xn = x*(0.5/std) + (0.5-mean)/std
    scale = (0.5 / IMAGENET_STD).reshape(3, 1)                       # (3, 1)
    shift = (0.5 - IMAGENET_MEAN) / IMAGENET_STD                     # (1, 3)
    w_f = (w * scale).astype(jnp.float32)                            # (3, 19)
    b_f = (jnp.reshape(b, (1, -1)) + shift @ w).astype(jnp.float32)  # (1, 19)

    # Keep x channel-planar; just flatten HW and pad to rows of 128 lanes.
    x3 = x_nchw.reshape(n, 3, hw).astype(jnp.float32)
    if hw_pad != hw:
        x3 = jnp.pad(x3, ((0, 0), (0, 0), (0, hw_pad - hw)))
    x4 = x3.reshape(n, 3, rows_pad, LANE)

    mask4 = pl.pallas_call(
        _seg_mask_kernel,
        out_shape=jax.ShapeDtypeStruct((n, rows_pad, LANE), jnp.bfloat16),
        grid_spec=pltpu.PrefetchScalarGridSpec(
            num_scalar_prefetch=0,
            grid=(n, rows_pad // tr),
            in_specs=[
                pl.BlockSpec((1, 3, tr, LANE), lambda i, t: (i, 0, t, 0)),
                pl.BlockSpec(memory_space=pltpu.MemorySpace.SMEM),   # w_f
                pl.BlockSpec(memory_space=pltpu.MemorySpace.SMEM),   # b_f
            ],
            out_specs=pl.BlockSpec((1, tr, LANE), lambda i, t: (i, t, 0)),
        ),
        compiler_params=pltpu.CompilerParams(
            dimension_semantics=("parallel", "parallel")),
    )(x4, w_f, b_f)

    # Padded tail rows hold garbage; sliced off here before use.
    return mask4.reshape(n, hw_pad)[:, :hw].reshape(n, hs, ws)


# ----------------------------------------------------------------------------
# Kernel 2: masked-depth MSE:
#   mean( ((dep - 2.7729) * (1 - mask))^2 )  over all elements of dep.
# Per-lane partial sums live in a (tile_rows, 128) f32 VMEM scratch; the single
# cross-lane reduction and the /numel happen only at the last grid step.
# ----------------------------------------------------------------------------
def _depth_loss_kernel(dep_ref, mask_ref, out_ref, acc_ref, *, inv_numel):
    bi = pl.program_id(0)
    ti = pl.program_id(1)

    @pl.when(jnp.logical_and(bi == 0, ti == 0))
    def _():
        acc_ref[...] = jnp.zeros_like(acc_ref)

    keep = 1.0 - mask_ref[...].astype(jnp.float32)       # (1, 1, TR, 128)
    diff = (dep_ref[...] - AVG_DEPTH) * keep             # (1, C, TR, 128)
    acc_ref[...] += jnp.sum(diff * diff, axis=(0, 1))    # (TR, 128) VPU adds

    @pl.when(jnp.logical_and(bi == pl.num_programs(0) - 1,
                             ti == pl.num_programs(1) - 1))
    def _():
        out_ref[...] = (jnp.sum(acc_ref[...]) * inv_numel).reshape(1, 1)


def depth_mse(dep_nchw, mask_nhw_up, tile_rows=512):
    """dep_nchw: (N, C, H, W); mask_nhw_up: (N, H, W) already resized."""
    n, c, h, w = dep_nchw.shape
    hw = h * w
    rows = pl.cdiv(hw, LANE)
    tr = min(tile_rows, _round_up(rows, SUBL))
    rows_pad = _round_up(rows, tr)
    hw_pad = rows_pad * LANE

    dep3 = dep_nchw.reshape(n, c, hw).astype(jnp.float32)
    mask3 = mask_nhw_up.reshape(n, 1, hw).astype(jnp.bfloat16)
    if hw_pad != hw:
        dep3 = jnp.pad(dep3, ((0, 0), (0, 0), (0, hw_pad - hw)))
        # pad mask with 1.0 so keep = 0 -> padded elements contribute nothing
        mask3 = jnp.pad(mask3, ((0, 0), (0, 0), (0, hw_pad - hw)),
                        constant_values=1.0)
    dep4 = dep3.reshape(n, c, rows_pad, LANE)
    mask4 = mask3.reshape(n, 1, rows_pad, LANE)
    inv_numel = 1.0 / float(n * c * h * w)

    out = pl.pallas_call(
        functools.partial(_depth_loss_kernel, inv_numel=inv_numel),
        out_shape=jax.ShapeDtypeStruct((1, 1), jnp.float32),
        grid_spec=pltpu.PrefetchScalarGridSpec(
            num_scalar_prefetch=0,
            grid=(n, rows_pad // tr),
            in_specs=[
                pl.BlockSpec((1, c, tr, LANE), lambda b, t: (b, 0, t, 0)),
                pl.BlockSpec((1, 1, tr, LANE), lambda b, t: (b, 0, t, 0)),
            ],
            out_specs=pl.BlockSpec((1, 1), lambda b, t: (0, 0)),
            scratch_shapes=[pltpu.VMEM((tr, LANE), jnp.float32)],
        ),
        compiler_params=pltpu.CompilerParams(
            dimension_semantics=("arbitrary", "arbitrary")),
    )(dep4, mask4)
    return out[0, 0]


# ----------------------------------------------------------------------------
# Glue: nearest-neighbour resize of the mask (pure index gather, as in
# F.interpolate(mode='nearest'): src = floor(dst * in/out)).
# ----------------------------------------------------------------------------
def _nearest_indices(out_size, in_size):
    idx = jnp.floor(jnp.arange(out_size, dtype=jnp.float32)
                    * (in_size / out_size)).astype(jnp.int32)
    return jnp.clip(idx, 0, in_size - 1)


def nearest_resize_mask(mask_nhw, h_out, w_out):
    n, hs, ws = mask_nhw.shape
    ri = _nearest_indices(h_out, hs)
    ci = _nearest_indices(w_out, ws)
    return mask_nhw[:, ri][:, :, ci]


# ----------------------------------------------------------------------------
# DepthLoss forward
# ----------------------------------------------------------------------------
def depth_loss_forward(x, dep, seg_w, seg_b):
    mask_s = seg_mask(x, seg_w, seg_b)                       # (N, Hs, Ws) bf16
    h, w = dep.shape[-2:]
    mask_up = nearest_resize_mask(mask_s, h, w)              # (N, H, W) bf16
    return depth_mse(dep, mask_up)


def depth_loss_reference(x, dep, seg_w, seg_b):
    """Pure-JAX reference with identical semantics (for a sanity check)."""
    n, _, hs, ws = x.shape
    x_pix = jnp.transpose(x, (0, 2, 3, 1)).reshape(-1, 3)
    xn = ((x_pix + 1.0) * 0.5 - IMAGENET_MEAN) / IMAGENET_STD
    logits = xn @ seg_w + seg_b
    mask = (jnp.argmax(logits, axis=-1) != 0).astype(jnp.float32)
    mask = mask.reshape(n, hs, ws)
    h, w = dep.shape[-2:]
    mask_up = nearest_resize_mask(mask, h, w)[:, None]       # (N,1,H,W)
    keep = 1.0 - mask_up
    diff = dep * keep - AVG_DEPTH * keep
    return jnp.mean(diff * diff)


if __name__ == "__main__":
    key = jax.random.PRNGKey(0)
    k1, k2, k3, k4 = jax.random.split(key, 4)

    # small deterministic inputs
    N, Hs, Ws = 2, 16, 16            # x: image fed to the parsing head
    H, W = 32, 32                    # dep: depth map resolution
    x = jax.random.uniform(k1, (N, 3, Hs, Ws), jnp.float32, -1.0, 1.0)
    dep = 2.5 + 0.5 * jax.random.normal(k2, (N, 1, H, W), jnp.float32)

    # deterministic synthetic parsing-head parameters (1x1 conv: 3 -> 19)
    seg_w = 0.5 * jax.random.normal(k3, (3, N_CLASSES), jnp.float32)
    seg_b = 0.1 * jax.random.normal(k4, (1, N_CLASSES), jnp.float32)

    loss_fn = jax.jit(depth_loss_forward)
    loss = jax.block_until_ready(loss_fn(x, dep, seg_w, seg_b))

    ref = jax.block_until_ready(depth_loss_reference(x, dep, seg_w, seg_b))
    assert jnp.allclose(loss, ref, atol=1e-5, rtol=1e-5), (loss, ref)

    print("KERNEL_OK")
</pallas_src>

<mosaic_0001>
module attributes {stable_mosaic.version = 11 : i64} {
  func.func @_seg_mask_kernel(%arg0: i32, %arg1: i32, %arg2: memref<1x3x16x128xf32, #tpu.memory_space<vmem>>, %arg3: memref<3x19xf32, #tpu.memory_space<smem>>, %arg4: memref<1x19xf32, #tpu.memory_space<smem>>, %arg5: memref<1x16x128xbf16, #tpu.memory_space<vmem>>) attributes {dimension_semantics = [#tpu.dimension_semantics<parallel>, #tpu.dimension_semantics<parallel>], iteration_bounds = array<i64: 2, 1>, scalar_prefetch = 0 : i64, scratch_operands = 0 : i64, tpu.core_type = #tpu.core_type<tc>, window_params = [{transform_indices = @transform_0, window_bounds = array<i64: 1, 3, 16, 128>}, {transform_indices = @transform_1, window_bounds = array<i64: 3, 19>}, {transform_indices = @transform_2, window_bounds = array<i64: 1, 19>}, {transform_indices = @transform_3, window_bounds = array<i64: 1, 16, 128>}]} {
    %c0 = arith.constant 0 : index
    %c0_0 = arith.constant 0 : index
    %c0_1 = arith.constant 0 : index
    %c0_2 = arith.constant 0 : index
    %0 = vector.load %arg2[%c0, %c0_0, %c0_1, %c0_2] : memref<1x3x16x128xf32, #tpu.memory_space<vmem>>, vector<1x3x16x128xf32>
    %1 = vector.extract_strided_slice %0 {offsets = [0, 0, 0, 0], sizes = [1, 1, 16, 128], strides = [1, 1, 1, 1]} : vector<1x3x16x128xf32> to vector<1x1x16x128xf32>
    %2 = vector.shape_cast %1 : vector<1x1x16x128xf32> to vector<16x128xf32>
    %3 = vector.extract_strided_slice %0 {offsets = [0, 1, 0, 0], sizes = [1, 1, 16, 128], strides = [1, 1, 1, 1]} : vector<1x3x16x128xf32> to vector<1x1x16x128xf32>
    %4 = vector.shape_cast %3 : vector<1x1x16x128xf32> to vector<16x128xf32>
    %5 = vector.extract_strided_slice %0 {offsets = [0, 2, 0, 0], sizes = [1, 1, 16, 128], strides = [1, 1, 1, 1]} : vector<1x3x16x128xf32> to vector<1x1x16x128xf32>
    %6 = vector.shape_cast %5 : vector<1x1x16x128xf32> to vector<16x128xf32>
    %c0_3 = arith.constant 0 : index
    %c0_4 = arith.constant 0 : index
    %7 = memref.load %arg3[%c0_3, %c0_4] : memref<3x19xf32, #tpu.memory_space<smem>>
    %8 = vector.broadcast %7 : f32 to vector<16x128xf32>
    %9 = arith.mulf %2, %8 : vector<16x128xf32>
    %c1 = arith.constant 1 : index
    %c0_5 = arith.constant 0 : index
    %10 = memref.load %arg3[%c1, %c0_5] : memref<3x19xf32, #tpu.memory_space<smem>>
    %11 = vector.broadcast %10 : f32 to vector<16x128xf32>
    %12 = arith.mulf %4, %11 : vector<16x128xf32>
    %13 = arith.addf %9, %12 : vector<16x128xf32>
    %c2 = arith.constant 2 : index
    %c0_6 = arith.constant 0 : index
    %14 = memref.load %arg3[%c2, %c0_6] : memref<3x19xf32, #tpu.memory_space<smem>>
    %15 = vector.broadcast %14 : f32 to vector<16x128xf32>
    %16 = arith.mulf %6, %15 : vector<16x128xf32>
    %17 = arith.addf %13, %16 : vector<16x128xf32>
    %c0_7 = arith.constant 0 : index
    %c0_8 = arith.constant 0 : index
    %18 = memref.load %arg4[%c0_7, %c0_8] : memref<1x19xf32, #tpu.memory_space<smem>>
    %19 = vector.broadcast %18 : f32 to vector<16x128xf32>
    %20 = arith.addf %17, %19 : vector<16x128xf32>
    %c0_9 = arith.constant 0 : index
    %c1_10 = arith.constant 1 : index
    %21 = memref.load %arg3[%c0_9, %c1_10] : memref<3x19xf32, #tpu.memory_space<smem>>
    %22 = vector.broadcast %21 : f32 to vector<16x128xf32>
    %23 = arith.mulf %2, %22 : vector<16x128xf32>
    %c1_11 = arith.constant 1 : index
    %c1_12 = arith.constant 1 : index
    %24 = memref.load %arg3[%c1_11, %c1_12] : memref<3x19xf32, #tpu.memory_space<smem>>
    %25 = vector.broadcast %24 : f32 to vector<16x128xf32>
    %26 = arith.mulf %4, %25 : vector<16x128xf32>
    %27 = arith.addf %23, %26 : vector<16x128xf32>
    %c2_13 = arith.constant 2 : index
    %c1_14 = arith.constant 1 : index
    %28 = memref.load %arg3[%c2_13, %c1_14] : memref<3x19xf32, #tpu.memory_space<smem>>
    %29 = vector.broadcast %28 : f32 to vector<16x128xf32>
    %30 = arith.mulf %6, %29 : vector<16x128xf32>
    %31 = arith.addf %27, %30 : vector<16x128xf32>
    %c0_15 = arith.constant 0 : index
    %c1_16 = arith.constant 1 : index
    %32 = memref.load %arg4[%c0_15, %c1_16] : memref<1x19xf32, #tpu.memory_space<smem>>
    %33 = vector.broadcast %32 : f32 to vector<16x128xf32>
    %34 = arith.addf %31, %33 : vector<16x128xf32>
    %c0_17 = arith.constant 0 : index
    %c2_18 = arith.constant 2 : index
    %35 = memref.load %arg3[%c0_17, %c2_18] : memref<3x19xf32, #tpu.memory_space<smem>>
    %36 = vector.broadcast %35 : f32 to vector<16x128xf32>
    %37 = arith.mulf %2, %36 : vector<16x128xf32>
    %c1_19 = arith.constant 1 : index
    %c2_20 = arith.constant 2 : index
    %38 = memref.load %arg3[%c1_19, %c2_20] : memref<3x19xf32, #tpu.memory_space<smem>>
    %39 = vector.broadcast %38 : f32 to vector<16x128xf32>
    %40 = arith.mulf %4, %39 : vector<16x128xf32>
    %41 = arith.addf %37, %40 : vector<16x128xf32>
    %c2_21 = arith.constant 2 : index
    %c2_22 = arith.constant 2 : index
    %42 = memref.load %arg3[%c2_21, %c2_22] : memref<3x19xf32, #tpu.memory_space<smem>>
    %43 = vector.broadcast %42 : f32 to vector<16x128xf32>
    %44 = arith.mulf %6, %43 : vector<16x128xf32>
    %45 = arith.addf %41, %44 : vector<16x128xf32>
    %c0_23 = arith.constant 0 : index
    %c2_24 = arith.constant 2 : index
    %46 = memref.load %arg4[%c0_23, %c2_24] : memref<1x19xf32, #tpu.memory_space<smem>>
    %47 = vector.broadcast %46 : f32 to vector<16x128xf32>
    %48 = arith.addf %45, %47 : vector<16x128xf32>
    %49 = arith.maximumf %34, %48 : vector<16x128xf32>
    %c0_25 = arith.constant 0 : index
    %c3 = arith.constant 3 : index
    %50 = memref.load %arg3[%c0_25, %c3] : memref<3x19xf32, #tpu.memory_space<smem>>
    %51 = vector.broadcast %50 : f32 to vector<16x128xf32>
    %52 = arith.mulf %2, %51 : vector<16x128xf32>
    %c1_26 = arith.constant 1 : index
    %c3_27 = arith.constant 3 : index
    %53 = memref.load %arg3[%c1_26, %c3_27] : memref<3x19xf32, #tpu.memory_space<smem>>
    %54 = vector.broadcast %53 : f32 to vector<16x128xf32>
    %55 = arith.mulf %4, %54 : vector<16x128xf32>
    %56 = arith.addf %52, %55 : vector<16x128xf32>
    %c2_28 = arith.constant 2 : index
    %c3_29 = arith.constant 3 : index
    %57 = memref.load %arg3[%c2_28, %c3_29] : memref<3x19xf32, #tpu.memory_space<smem>>
    %58 = vector.broadcast %57 : f32 to vector<16x128xf32>
    %59 = arith.mulf %6, %58 : vector<16x128xf32>
    %60 = arith.addf %56, %59 : vector<16x128xf32>
    %c0_30 = arith.constant 0 : index
    %c3_31 = arith.constant 3 : index
    %61 = memref.load %arg4[%c0_30, %c3_31] : memref<1x19xf32, #tpu.memory_space<smem>>
    %62 = vector.broadcast %61 : f32 to vector<16x128xf32>
    %63 = arith.addf %60, %62 : vector<16x128xf32>
    %64 = arith.maximumf %49, %63 : vector<16x128xf32>
    %c0_32 = arith.constant 0 : index
    %c4 = arith.constant 4 : index
    %65 = memref.load %arg3[%c0_32, %c4] : memref<3x19xf32, #tpu.memory_space<smem>>
    %66 = vector.broadcast %65 : f32 to vector<16x128xf32>
    %67 = arith.mulf %2, %66 : vector<16x128xf32>
    %c1_33 = arith.constant 1 : index
    %c4_34 = arith.constant 4 : index
    %68 = memref.load %arg3[%c1_33, %c4_34] : memref<3x19xf32, #tpu.memory_space<smem>>
    %69 = vector.broadcast %68 : f32 to vector<16x128xf32>
    %70 = arith.mulf %4, %69 : vector<16x128xf32>
    %71 = arith.addf %67, %70 : vector<16x128xf32>
    %c2_35 = arith.constant 2 : index
    %c4_36 = arith.constant 4 : index
    %72 = memref.load %arg3[%c2_35, %c4_36] : memref<3x19xf32, #tpu.memory_space<smem>>
    %73 = vector.broadcast %72 : f32 to vector<16x128xf32>
    %74 = arith.mulf %6, %73 : vector<16x128xf32>
    %75 = arith.addf %71, %74 : vector<16x128xf32>
    %c0_37 = arith.constant 0 : index
    %c4_38 = arith.constant 4 : index
    %76 = memref.load %arg4[%c0_37, %c4_38] : memref<1x19xf32, #tpu.memory_space<smem>>
    %77 = vector.broadcast %76 : f32 to vector<16x128xf32>
    %78 = arith.addf %75, %77 : vector<16x128xf32>
    %79 = arith.maximumf %64, %78 : vector<16x128xf32>
    %c0_39 = arith.constant 0 : index
    %c5 = arith.constant 5 : index
    %80 = memref.load %arg3[%c0_39, %c5] : memref<3x19xf32, #tpu.memory_space<smem>>
    %81 = vector.broadcast %80 : f32 to vector<16x128xf32>
    %82 = arith.mulf %2, %81 : vector<16x128xf32>
    %c1_40 = arith.constant 1 : index
    %c5_41 = arith.constant 5 : index
    %83 = memref.load %arg3[%c1_40, %c5_41] : memref<3x19xf32, #tpu.memory_space<smem>>
    %84 = vector.broadcast %83 : f32 to vector<16x128xf32>
    %85 = arith.mulf %4, %84 : vector<16x128xf32>
    %86 = arith.addf %82, %85 : vector<16x128xf32>
    %c2_42 = arith.constant 2 : index
    %c5_43 = arith.constant 5 : index
    %87 = memref.load %arg3[%c2_42, %c5_43] : memref<3x19xf32, #tpu.memory_space<smem>>
    %88 = vector.broadcast %87 : f32 to vector<16x128xf32>
    %89 = arith.mulf %6, %88 : vector<16x128xf32>
    %90 = arith.addf %86, %89 : vector<16x128xf32>
    %c0_44 = arith.constant 0 : index
    %c5_45 = arith.constant 5 : index
    %91 = memref.load %arg4[%c0_44, %c5_45] : memref<1x19xf32, #tpu.memory_space<smem>>
    %92 = vector.broadcast %91 : f32 to vector<16x128xf32>
    %93 = arith.addf %90, %92 : vector<16x128xf32>
    %94 = arith.maximumf %79, %93 : vector<16x128xf32>
    %c0_46 = arith.constant 0 : index
    %c6 = arith.constant 6 : index
    %95 = memref.load %arg3[%c0_46, %c6] : memref<3x19xf32, #tpu.memory_space<smem>>
    %96 = vector.broadcast %95 : f32 to vector<16x128xf32>
    %97 = arith.mulf %2, %96 : vector<16x128xf32>
    %c1_47 = arith.constant 1 : index
    %c6_48 = arith.constant 6 : index
    %98 = memref.load %arg3[%c1_47, %c6_48] : memref<3x19xf32, #tpu.memory_space<smem>>
    %99 = vector.broadcast %98 : f32 to vector<16x128xf32>
    %100 = arith.mulf %4, %99 : vector<16x128xf32>
    %101 = arith.addf %97, %100 : vector<16x128xf32>
    %c2_49 = arith.constant 2 : index
    %c6_50 = arith.constant 6 : index
    %102 = memref.load %arg3[%c2_49, %c6_50] : memref<3x19xf32, #tpu.memory_space<smem>>
    %103 = vector.broadcast %102 : f32 to vector<16x128xf32>
    %104 = arith.mulf %6, %103 : vector<16x128xf32>
    %105 = arith.addf %101, %104 : vector<16x128xf32>
    %c0_51 = arith.constant 0 : index
    %c6_52 = arith.constant 6 : index
    %106 = memref.load %arg4[%c0_51, %c6_52] : memref<1x19xf32, #tpu.memory_space<smem>>
    %107 = vector.broadcast %106 : f32 to vector<16x128xf32>
    %108 = arith.addf %105, %107 : vector<16x128xf32>
    %109 = arith.maximumf %94, %108 : vector<16x128xf32>
    %c0_53 = arith.constant 0 : index
    %c7 = arith.constant 7 : index
    %110 = memref.load %arg3[%c0_53, %c7] : memref<3x19xf32, #tpu.memory_space<smem>>
    %111 = vector.broadcast %110 : f32 to vector<16x128xf32>
    %112 = arith.mulf %2, %111 : vector<16x128xf32>
    %c1_54 = arith.constant 1 : index
    %c7_55 = arith.constant 7 : index
    %113 = memref.load %arg3[%c1_54, %c7_55] : memref<3x19xf32, #tpu.memory_space<smem>>
    %114 = vector.broadcast %113 : f32 to vector<16x128xf32>
    %115 = arith.mulf %4, %114 : vector<16x128xf32>
    %116 = arith.addf %112, %115 : vector<16x128xf32>
    %c2_56 = arith.constant 2 : index
    %c7_57 = arith.constant 7 : index
    %117 = memref.load %arg3[%c2_56, %c7_57] : memref<3x19xf32, #tpu.memory_space<smem>>
    %118 = vector.broadcast %117 : f32 to vector<16x128xf32>
    %119 = arith.mulf %6, %118 : vector<16x128xf32>
    %120 = arith.addf %116, %119 : vector<16x128xf32>
    %c0_58 = arith.constant 0 : index
    %c7_59 = arith.constant 7 : index
    %121 = memref.load %arg4[%c0_58, %c7_59] : memref<1x19xf32, #tpu.memory_space<smem>>
    %122 = vector.broadcast %121 : f32 to vector<16x128xf32>
    %123 = arith.addf %120, %122 : vector<16x128xf32>
    %124 = arith.maximumf %109, %123 : vector<16x128xf32>
    %c0_60 = arith.constant 0 : index
    %c8 = arith.constant 8 : index
    %125 = memref.load %arg3[%c0_60, %c8] : memref<3x19xf32, #tpu.memory_space<smem>>
    %126 = vector.broadcast %125 : f32 to vector<16x128xf32>
    %127 = arith.mulf %2, %126 : vector<16x128xf32>
    %c1_61 = arith.constant 1 : index
    %c8_62 = arith.constant 8 : index
    %128 = memref.load %arg3[%c1_61, %c8_62] : memref<3x19xf32, #tpu.memory_space<smem>>
    %129 = vector.broadcast %128 : f32 to vector<16x128xf32>
    %130 = arith.mulf %4, %129 : vector<16x128xf32>
    %131 = arith.addf %127, %130 : vector<16x128xf32>
    %c2_63 = arith.constant 2 : index
    %c8_64 = arith.constant 8 : index
    %132 = memref.load %arg3[%c2_63, %c8_64] : memref<3x19xf32, #tpu.memory_space<smem>>
    %133 = vector.broadcast %132 : f32 to vector<16x128xf32>
    %134 = arith.mulf %6, %133 : vector<16x128xf32>
    %135 = arith.addf %131, %134 : vector<16x128xf32>
    %c0_65 = arith.constant 0 : index
    %c8_66 = arith.constant 8 : index
    %136 = memref.load %arg4[%c0_65, %c8_66] : memref<1x19xf32, #tpu.memory_space<smem>>
    %137 = vector.broadcast %136 : f32 to vector<16x128xf32>
    %138 = arith.addf %135, %137 : vector<16x128xf32>
    %139 = arith.maximumf %124, %138 : vector<16x128xf32>
    %c0_67 = arith.constant 0 : index
    %c9 = arith.constant 9 : index
    %140 = memref.load %arg3[%c0_67, %c9] : memref<3x19xf32, #tpu.memory_space<smem>>
    %141 = vector.broadcast %140 : f32 to vector<16x128xf32>
    %142 = arith.mulf %2, %141 : vector<16x128xf32>
    %c1_68 = arith.constant 1 : index
    %c9_69 = arith.constant 9 : index
    %143 = memref.load %arg3[%c1_68, %c9_69] : memref<3x19xf32, #tpu.memory_space<smem>>
    %144 = vector.broadcast %143 : f32 to vector<16x128xf32>
    %145 = arith.mulf %4, %144 : vector<16x128xf32>
    %146 = arith.addf %142, %145 : vector<16x128xf32>
    %c2_70 = arith.constant 2 : index
    %c9_71 = arith.constant 9 : index
    %147 = memref.load %arg3[%c2_70, %c9_71] : memref<3x19xf32, #tpu.memory_space<smem>>
    %148 = vector.broadcast %147 : f32 to vector<16x128xf32>
    %149 = arith.mulf %6, %148 : vector<16x128xf32>
    %150 = arith.addf %146, %149 : vector<16x128xf32>
    %c0_72 = arith.constant 0 : index
    %c9_73 = arith.constant 9 : index
    %151 = memref.load %arg4[%c0_72, %c9_73] : memref<1x19xf32, #tpu.memory_space<smem>>
    %152 = vector.broadcast %151 : f32 to vector<16x128xf32>
    %153 = arith.addf %150, %152 : vector<16x128xf32>
    %154 = arith.maximumf %139, %153 : vector<16x128xf32>
    %c0_74 = arith.constant 0 : index
    %c10 = arith.constant 10 : index
    %155 = memref.load %arg3[%c0_74, %c10] : memref<3x19xf32, #tpu.memory_space<smem>>
    %156 = vector.broadcast %155 : f32 to vector<16x128xf32>
    %157 = arith.mulf %2, %156 : vector<16x128xf32>
    %c1_75 = arith.constant 1 : index
    %c10_76 = arith.constant 10 : index
    %158 = memref.load %arg3[%c1_75, %c10_76] : memref<3x19xf32, #tpu.memory_space<smem>>
    %159 = vector.broadcast %158 : f32 to vector<16x128xf32>
    %160 = arith.mulf %4, %159 : vector<16x128xf32>
    %161 = arith.addf %157, %160 : vector<16x128xf32>
    %c2_77 = arith.constant 2 : index
    %c10_78 = arith.constant 10 : index
    %162 = memref.load %arg3[%c2_77, %c10_78] : memref<3x19xf32, #tpu.memory_space<smem>>
    %163 = vector.broadcast %162 : f32 to vector<16x128xf32>
    %164 = arith.mulf %6, %163 : vector<16x128xf32>
    %165 = arith.addf %161, %164 : vector<16x128xf32>
    %c0_79 = arith.constant 0 : index
    %c10_80 = arith.constant 10 : index
    %166 = memref.load %arg4[%c0_79, %c10_80] : memref<1x19xf32, #tpu.memory_space<smem>>
    %167 = vector.broadcast %166 : f32 to vector<16x128xf32>
    %168 = arith.addf %165, %167 : vector<16x128xf32>
    %169 = arith.maximumf %154, %168 : vector<16x128xf32>
    %c0_81 = arith.constant 0 : index
    %c11 = arith.constant 11 : index
    %170 = memref.load %arg3[%c0_81, %c11] : memref<3x19xf32, #tpu.memory_space<smem>>
    %171 = vector.broadcast %170 : f32 to vector<16x128xf32>
    %172 = arith.mulf %2, %171 : vector<16x128xf32>
    %c1_82 = arith.constant 1 : index
    %c11_83 = arith.constant 11 : index
    %173 = memref.load %arg3[%c1_82, %c11_83] : memref<3x19xf32, #tpu.memory_space<smem>>
    %174 = vector.broadcast %173 : f32 to vector<16x128xf32>
    %175 = arith.mulf %4, %174 : vector<16x128xf32>
    %176 = arith.addf %172, %175 : vector<16x128xf32>
    %c2_84 = arith.constant 2 : index
    %c11_85 = arith.constant 11 : index
    %177 = memref.load %arg3[%c2_84, %c11_85] : memref<3x19xf32, #tpu.memory_space<smem>>
    %178 = vector.broadcast %177 : f32 to vector<16x128xf32>
    %179 = arith.mulf %6, %178 : vector<16x128xf32>
    %180 = arith.addf %176, %179 : vector<16x128xf32>
    %c0_86 = arith.constant 0 : index
    %c11_87 = arith.constant 11 : index
    %181 = memref.load %arg4[%c0_86, %c11_87] : memref<1x19xf32, #tpu.memory_space<smem>>
    %182 = vector.broadcast %181 : f32 to vector<16x128xf32>
    %183 = arith.addf %180, %182 : vector<16x128xf32>
    %184 = arith.maximumf %169, %183 : vector<16x128xf32>
    %c0_88 = arith.constant 0 : index
    %c12 = arith.constant 12 : index
    %185 = memref.load %arg3[%c0_88, %c12] : memref<3x19xf32, #tpu.memory_space<smem>>
    %186 = vector.broadcast %185 : f32 to vector<16x128xf32>
    %187 = arith.mulf %2, %186 : vector<16x128xf32>
    %c1_89 = arith.constant 1 : index
    %c12_90 = arith.constant 12 : index
    %188 = memref.load %arg3[%c1_89, %c12_90] : memref<3x19xf32, #tpu.memory_space<smem>>
    %189 = vector.broadcast %188 : f32 to vector<16x128xf32>
    %190 = arith.mulf %4, %189 : vector<16x128xf32>
    %191 = arith.addf %187, %190 : vector<16x128xf32>
    %c2_91 = arith.constant 2 : index
    %c12_92 = arith.constant 12 : index
    %192 = memref.load %arg3[%c2_91, %c12_92] : memref<3x19xf32, #tpu.memory_space<smem>>
    %193 = vector.broadcast %192 : f32 to vector<16x128xf32>
    %194 = arith.mulf %6, %193 : vector<16x128xf32>
    %195 = arith.addf %191, %194 : vector<16x128xf32>
    %c0_93 = arith.constant 0 : index
    %c12_94 = arith.constant 12 : index
    %196 = memref.load %arg4[%c0_93, %c12_94] : memref<1x19xf32, #tpu.memory_space<smem>>
    %197 = vector.broadcast %196 : f32 to vector<16x128xf32>
    %198 = arith.addf %195, %197 : vector<16x128xf32>
    %199 = arith.maximumf %184, %198 : vector<16x128xf32>
    %c0_95 = arith.constant 0 : index
    %c13 = arith.constant 13 : index
    %200 = memref.load %arg3[%c0_95, %c13] : memref<3x19xf32, #tpu.memory_space<smem>>
    %201 = vector.broadcast %200 : f32 to vector<16x128xf32>
    %202 = arith.mulf %2, %201 : vector<16x128xf32>
    %c1_96 = arith.constant 1 : index
    %c13_97 = arith.constant 13 : index
    %203 = memref.load %arg3[%c1_96, %c13_97] : memref<3x19xf32, #tpu.memory_space<smem>>
    %204 = vector.broadcast %203 : f32 to vector<16x128xf32>
    %205 = arith.mulf %4, %204 : vector<16x128xf32>
    %206 = arith.addf %202, %205 : vector<16x128xf32>
    %c2_98 = arith.constant 2 : index
    %c13_99 = arith.constant 13 : index
    %207 = memref.load %arg3[%c2_98, %c13_99] : memref<3x19xf32, #tpu.memory_space<smem>>
    %208 = vector.broadcast %207 : f32 to vector<16x128xf32>
    %209 = arith.mulf %6, %208 : vector<16x128xf32>
    %210 = arith.addf %206, %209 : vector<16x128xf32>
    %c0_100 = arith.constant 0 : index
    %c13_101 = arith.constant 13 : index
    %211 = memref.load %arg4[%c0_100, %c13_101] : memref<1x19xf32, #tpu.memory_space<smem>>
    %212 = vector.broadcast %211 : f32 to vector<16x128xf32>
    %213 = arith.addf %210, %212 : vector<16x128xf32>
    %214 = arith.maximumf %199, %213 : vector<16x128xf32>
    %c0_102 = arith.constant 0 : index
    %c14 = arith.constant 14 : index
    %215 = memref.load %arg3[%c0_102, %c14] : memref<3x19xf32, #tpu.memory_space<smem>>
    %216 = vector.broadcast %215 : f32 to vector<16x128xf32>
    %217 = arith.mulf %2, %216 : vector<16x128xf32>
    %c1_103 = arith.constant 1 : index
    %c14_104 = arith.constant 14 : index
    %218 = memref.load %arg3[%c1_103, %c14_104] : memref<3x19xf32, #tpu.memory_space<smem>>
    %219 = vector.broadcast %218 : f32 to vector<16x128xf32>
    %220 = arith.mulf %4, %219 : vector<16x128xf32>
    %221 = arith.addf %217, %220 : vector<16x128xf32>
    %c2_105 = arith.constant 2 : index
    %c14_106 = arith.constant 14 : index
    %222 = memref.load %arg3[%c2_105, %c14_106] : memref<3x19xf32, #tpu.memory_space<smem>>
    %223 = vector.broadcast %222 : f32 to vector<16x128xf32>
    %224 = arith.mulf %6, %223 : vector<16x128xf32>
    %225 = arith.addf %221, %224 : vector<16x128xf32>
    %c0_107 = arith.constant 0 : index
    %c14_108 = arith.constant 14 : index
    %226 = memref.load %arg4[%c0_107, %c14_108] : memref<1x19xf32, #tpu.memory_space<smem>>
    %227 = vector.broadcast %226 : f32 to vector<16x128xf32>
    %228 = arith.addf %225, %227 : vector<16x128xf32>
    %229 = arith.maximumf %214, %228 : vector<16x128xf32>
    %c0_109 = arith.constant 0 : index
    %c15 = arith.constant 15 : index
    %230 = memref.load %arg3[%c0_109, %c15] : memref<3x19xf32, #tpu.memory_space<smem>>
    %231 = vector.broadcast %230 : f32 to vector<16x128xf32>
    %232 = arith.mulf %2, %231 : vector<16x128xf32>
    %c1_110 = arith.constant 1 : index
    %c15_111 = arith.constant 15 : index
    %233 = memref.load %arg3[%c1_110, %c15_111] : memref<3x19xf32, #tpu.memory_space<smem>>
    %234 = vector.broadcast %233 : f32 to vector<16x128xf32>
    %235 = arith.mulf %4, %234 : vector<16x128xf32>
    %236 = arith.addf %232, %235 : vector<16x128xf32>
    %c2_112 = arith.constant 2 : index
    %c15_113 = arith.constant 15 : index
    %237 = memref.load %arg3[%c2_112, %c15_113] : memref<3x19xf32, #tpu.memory_space<smem>>
    %238 = vector.broadcast %237 : f32 to vector<16x128xf32>
    %239 = arith.mulf %6, %238 : vector<16x128xf32>
    %240 = arith.addf %236, %239 : vector<16x128xf32>
    %c0_114 = arith.constant 0 : index
    %c15_115 = arith.constant 15 : index
    %241 = memref.load %arg4[%c0_114, %c15_115] : memref<1x19xf32, #tpu.memory_space<smem>>
    %242 = vector.broadcast %241 : f32 to vector<16x128xf32>
    %243 = arith.addf %240, %242 : vector<16x128xf32>
    %244 = arith.maximumf %229, %243 : vector<16x128xf32>
    %c0_116 = arith.constant 0 : index
    %c16 = arith.constant 16 : index
    %245 = memref.load %arg3[%c0_116, %c16] : memref<3x19xf32, #tpu.memory_space<smem>>
    %246 = vector.broadcast %245 : f32 to vector<16x128xf32>
    %247 = arith.mulf %2, %246 : vector<16x128xf32>
    %c1_117 = arith.constant 1 : index
    %c16_118 = arith.constant 16 : index
    %248 = memref.load %arg3[%c1_117, %c16_118] : memref<3x19xf32, #tpu.memory_space<smem>>
    %249 = vector.broadcast %248 : f32 to vector<16x128xf32>
    %250 = arith.mulf %4, %249 : vector<16x128xf32>
    %251 = arith.addf %247, %250 : vector<16x128xf32>
    %c2_119 = arith.constant 2 : index
    %c16_120 = arith.constant 16 : index
    %252 = memref.load %arg3[%c2_119, %c16_120] : memref<3x19xf32, #tpu.memory_space<smem>>
    %253 = vector.broadcast %252 : f32 to vector<16x128xf32>
    %254 = arith.mulf %6, %253 : vector<16x128xf32>
    %255 = arith.addf %251, %254 : vector<16x128xf32>
    %c0_121 = arith.constant 0 : index
    %c16_122 = arith.constant 16 : index
    %256 = memref.load %arg4[%c0_121, %c16_122] : memref<1x19xf32, #tpu.memory_space<smem>>
    %257 = vector.broadcast %256 : f32 to vector<16x128xf32>
    %258 = arith.addf %255, %257 : vector<16x128xf32>
    %259 = arith.maximumf %244, %258 : vector<16x128xf32>
    %c0_123 = arith.constant 0 : index
    %c17 = arith.constant 17 : index
    %260 = memref.load %arg3[%c0_123, %c17] : memref<3x19xf32, #tpu.memory_space<smem>>
    %261 = vector.broadcast %260 : f32 to vector<16x128xf32>
    %262 = arith.mulf %2, %261 : vector<16x128xf32>
    %c1_124 = arith.constant 1 : index
    %c17_125 = arith.constant 17 : index
    %263 = memref.load %arg3[%c1_124, %c17_125] : memref<3x19xf32, #tpu.memory_space<smem>>
    %264 = vector.broadcast %263 : f32 to vector<16x128xf32>
    %265 = arith.mulf %4, %264 : vector<16x128xf32>
    %266 = arith.addf %262, %265 : vector<16x128xf32>
    %c2_126 = arith.constant 2 : index
    %c17_127 = arith.constant 17 : index
    %267 = memref.load %arg3[%c2_126, %c17_127] : memref<3x19xf32, #tpu.memory_space<smem>>
    %268 = vector.broadcast %267 : f32 to vector<16x128xf32>
    %269 = arith.mulf %6, %268 : vector<16x128xf32>
    %270 = arith.addf %266, %269 : vector<16x128xf32>
    %c0_128 = arith.constant 0 : index
    %c17_129 = arith.constant 17 : index
    %271 = memref.load %arg4[%c0_128, %c17_129] : memref<1x19xf32, #tpu.memory_space<smem>>
    %272 = vector.broadcast %271 : f32 to vector<16x128xf32>
    %273 = arith.addf %270, %272 : vector<16x128xf32>
    %274 = arith.maximumf %259, %273 : vector<16x128xf32>
    %c0_130 = arith.constant 0 : index
    %c18 = arith.constant 18 : index
    %275 = memref.load %arg3[%c0_130, %c18] : memref<3x19xf32, #tpu.memory_space<smem>>
    %276 = vector.broadcast %275 : f32 to vector<16x128xf32>
    %277 = arith.mulf %2, %276 : vector<16x128xf32>
    %c1_131 = arith.constant 1 : index
    %c18_132 = arith.constant 18 : index
    %278 = memref.load %arg3[%c1_131, %c18_132] : memref<3x19xf32, #tpu.memory_space<smem>>
    %279 = vector.broadcast %278 : f32 to vector<16x128xf32>
    %280 = arith.mulf %4, %279 : vector<16x128xf32>
    %281 = arith.addf %277, %280 : vector<16x128xf32>
    %c2_133 = arith.constant 2 : index
    %c18_134 = arith.constant 18 : index
    %282 = memref.load %arg3[%c2_133, %c18_134] : memref<3x19xf32, #tpu.memory_space<smem>>
    %283 = vector.broadcast %282 : f32 to vector<16x128xf32>
    %284 = arith.mulf %6, %283 : vector<16x128xf32>
    %285 = arith.addf %281, %284 : vector<16x128xf32>
    %c0_135 = arith.constant 0 : index
    %c18_136 = arith.constant 18 : index
    %286 = memref.load %arg4[%c0_135, %c18_136] : memref<1x19xf32, #tpu.memory_space<smem>>
    %287 = vector.broadcast %286 : f32 to vector<16x128xf32>
    %288 = arith.addf %285, %287 : vector<16x128xf32>
    %289 = arith.maximumf %274, %288 : vector<16x128xf32>
    %290 = arith.cmpf ogt, %289, %20 : vector<16x128xf32>
    %291 = arith.extui %290 : vector<16x128xi1> to vector<16x128xi32>
    %292 = arith.sitofp %291 : vector<16x128xi32> to vector<16x128xf32>
    %293 = arith.truncf %292 : vector<16x128xf32> to vector<16x128xbf16>
    %294 = vector.shape_cast %293 : vector<16x128xbf16> to vector<1x16x128xbf16>
    %c0_137 = arith.constant 0 : index
    %c0_138 = arith.constant 0 : index
    %c0_139 = arith.constant 0 : index
    %295 = vector.load %arg5[%c0_137, %c0_138, %c0_139] : memref<1x16x128xbf16, #tpu.memory_space<vmem>>, vector<1x16x128xbf16>
    tpu.vector_store %arg5[%c0_137, %c0_138, %c0_139], %294 {strides = array<i32>} : memref<1x16x128xbf16, #tpu.memory_space<vmem>>, vector<1x16x128xbf16>,
    return
  }
  func.func @transform_0(%arg0: i32, %arg1: i32) -> (i32, i32, i32, i32) {
    %c0_i32 = arith.constant 0 : i32
    %c0_i32_0 = arith.constant 0 : i32
    %c0_i32_1 = arith.constant 0 : i32
    return %arg0, %c0_i32, %arg1, %c0_i32_0 : i32, i32, i32, i32
  }
  func.func @transform_1(%arg0: i32, %arg1: i32) -> (i32, i32) {
    %c0_i32 = arith.constant 0 : i32
    %c0_i32_0 = arith.constant 0 : i32
    %c0_i32_1 = arith.constant 0 : i32
    return %c0_i32, %c0_i32_0 : i32, i32
  }
  func.func @transform_2(%arg0: i32, %arg1: i32) -> (i32, i32) {
    %c0_i32 = arith.constant 0 : i32
    %c0_i32_0 = arith.constant 0 : i32
    %c0_i32_1 = arith.constant 0 : i32
    return %c0_i32, %c0_i32_0 : i32, i32
  }
  func.func @transform_3(%arg0: i32, %arg1: i32) -> (i32, i32, i32) {
    %c0_i32 = arith.constant 0 : i32
    %c0_i32_0 = arith.constant 0 : i32
    return %arg0, %arg1, %c0_i32 : i32, i32, i32
  }
}

module attributes {stable_mosaic.version = 11 : i64} {
  func.func @_depth_loss_kernel(%arg0: i32, %arg1: i32, %arg2: memref<1x1x16x128xf32, #tpu.memory_space<vmem>>, %arg3: memref<1x1x16x128xbf16, #tpu.memory_space<vmem>>, %arg4: memref<1x1xf32, #tpu.memory_space<vmem>>, %arg5: memref<16x128xf32, #tpu.memory_space<vmem>>) attributes {dimension_semantics = [#tpu.dimension_semantics<arbitrary>, #tpu.dimension_semantics<arbitrary>], iteration_bounds = array<i64: 2, 1>, scalar_prefetch = 0 : i64, scratch_operands = 1 : i64, tpu.core_type = #tpu.core_type<tc>, window_params = [{transform_indices = @transform_0, window_bounds = array<i64: 1, 1, 16, 128>}, {transform_indices = @transform_1, window_bounds = array<i64: 1, 1, 16, 128>}, {pipeline_mode = #tpu.pipeline_mode<synchronous>, transform_indices = @transform_2, window_bounds = array<i64: 1, 1>}]} {
    %c0_i32 = arith.constant 0 : i32
    %0 = arith.cmpi eq, %arg0, %c0_i32 : i32
    %c0_i32_0 = arith.constant 0 : i32
    %1 = arith.cmpi eq, %arg1, %c0_i32_0 : i32
    %2 = arith.andi %0, %1 : i1
    %3 = arith.extui %2 : i1 to i32
    %c0_i32_1 = arith.constant 0 : i32
    %4 = arith.cmpi ne, %3, %c0_i32_1 : i32
    scf.if %4 {
      %cst_17 = arith.constant 0.000000e+00 : f32
      %23 = vector.broadcast %cst_17 : f32 to vector<16x128xf32>
      %c0_18 = arith.constant 0 : index
      %c0_19 = arith.constant 0 : index
      %24 = vector.load %arg5[%c0_18, %c0_19] : memref<16x128xf32, #tpu.memory_space<vmem>>, vector<16x128xf32>
      tpu.vector_store %arg5[%c0_18, %c0_19], %23 {strides = array<i32>} : memref<16x128xf32, #tpu.memory_space<vmem>>, vector<16x128xf32>,
    } else {
    }
    %c0 = arith.constant 0 : index
    %c0_2 = arith.constant 0 : index
    %c0_3 = arith.constant 0 : index
    %c0_4 = arith.constant 0 : index
    %5 = vector.load %arg3[%c0, %c0_2, %c0_3, %c0_4] : memref<1x1x16x128xbf16, #tpu.memory_space<vmem>>, vector<1x1x16x128xbf16>
    %6 = arith.extf %5 : vector<1x1x16x128xbf16> to vector<1x1x16x128xf32>
    %cst = arith.constant 1.000000e+00 : f32
    %7 = vector.broadcast %cst : f32 to vector<1x1x16x128xf32>
    %8 = arith.subf %7, %6 : vector<1x1x16x128xf32>
    %c0_5 = arith.constant 0 : index
    %c0_6 = arith.constant 0 : index
    %c0_7 = arith.constant 0 : index
    %c0_8 = arith.constant 0 : index
    %9 = vector.load %arg2[%c0_5, %c0_6, %c0_7, %c0_8] : memref<1x1x16x128xf32, #tpu.memory_space<vmem>>, vector<1x1x16x128xf32>
    %cst_9 = arith.constant 2.772900e+00 : f32
    %10 = vector.broadcast %cst_9 : f32 to vector<1x1x16x128xf32>
    %11 = arith.subf %9, %10 : vector<1x1x16x128xf32>
    %12 = arith.mulf %11, %8 : vector<1x1x16x128xf32>
    %c0_10 = arith.constant 0 : index
    %c0_11 = arith.constant 0 : index
    %13 = vector.load %arg5[%c0_10, %c0_11] : memref<16x128xf32, #tpu.memory_space<vmem>>, vector<16x128xf32>
    %14 = arith.mulf %12, %12 : vector<1x1x16x128xf32>
    %cst_12 = arith.constant dense<0.000000e+00> : vector<16x128xf32>
    %15 = vector.multi_reduction <add>, %14, %cst_12 [0, 1] : vector<1x1x16x128xf32> to vector<16x128xf32>
    %16 = arith.addf %13, %15 : vector<16x128xf32>
    %c0_13 = arith.constant 0 : index
    %c0_14 = arith.constant 0 : index
    %17 = vector.load %arg5[%c0_13, %c0_14] : memref<16x128xf32, #tpu.memory_space<vmem>>, vector<16x128xf32>
    tpu.vector_store %arg5[%c0_13, %c0_14], %16 {strides = array<i32>} : memref<16x128xf32, #tpu.memory_space<vmem>>, vector<16x128xf32>,
    %c1_i32 = arith.constant 1 : i32
    %18 = arith.cmpi eq, %arg0, %c1_i32 : i32
    %c0_i32_15 = arith.constant 0 : i32
    %19 = arith.cmpi eq, %arg1, %c0_i32_15 : i32
    %20 = arith.andi %18, %19 : i1
    %21 = arith.extui %20 : i1 to i32
    %c0_i32_16 = arith.constant 0 : i32
    %22 = arith.cmpi ne, %21, %c0_i32_16 : i32
    scf.if %22 {
      %c0_17 = arith.constant 0 : index
      %c0_18 = arith.constant 0 : index
      %23 = vector.load %arg5[%c0_17, %c0_18] : memref<16x128xf32, #tpu.memory_space<vmem>>, vector<16x128xf32>
      %24 = vector.shape_cast %23 : vector<16x128xf32> to vector<1x16x128xf32>
      %cst_19 = arith.constant dense<0.000000e+00> : vector<1xf32>
      %25 = vector.multi_reduction <add>, %24, %cst_19 [1, 2] : vector<1x16x128xf32> to vector<1xf32>
      %26 = vector.shape_cast %25 : vector<1xf32> to vector<1x1x1xf32>
      %27 = vector.extract %26[0, 0, 0] : f32 from vector<1x1x1xf32>
      %cst_20 = arith.constant 4.8828125E-4 : f32
      %28 = arith.mulf %27, %cst_20 : f32
      %29 = vector.broadcast %28 : f32 to vector<1x1xf32>
      %c0_21 = arith.constant 0 : index
      %c0_22 = arith.constant 0 : index
      %30 = vector.load %arg4[%c0_21, %c0_22] : memref<1x1xf32, #tpu.memory_space<vmem>>, vector<1x1xf32>
      tpu.vector_store %arg4[%c0_21, %c0_22], %29 {strides = array<i32>} : memref<1x1xf32, #tpu.memory_space<vmem>>, vector<1x1xf32>,
    } else {
    }
    return
  }
  func.func @transform_0(%arg0: i32, %arg1: i32) -> (i32, i32, i32, i32) {
    %c0_i32 = arith.constant 0 : i32
    %c0_i32_0 = arith.constant 0 : i32
    %c0_i32_1 = arith.constant 0 : i32
    return %arg0, %c0_i32, %arg1, %c0_i32_0 : i32, i32, i32, i32
  }
  func.func @transform_1(%arg0: i32, %arg1: i32) -> (i32, i32, i32, i32) {
    %c0_i32 = arith.constant 0 : i32
    %c0_i32_0 = arith.constant 0 : i32
    %c0_i32_1 = arith.constant 0 : i32
    return %arg0, %c0_i32, %arg1, %c0_i32_0 : i32, i32, i32, i32
  }
  func.func @transform_2(%arg0: i32, %arg1: i32) -> (i32, i32) {
    %c0_i32 = arith.constant 0 : i32
    %c0_i32_0 = arith.constant 0 : i32
    %c0_i32_1 = arith.constant 0 : i32
    return %c0_i32, %c0_i32_0 : i32, i32
  }
}

</mosaic_0001>

<llo_original>
// kernel: depth_loss_forward.2
$region0: #{depth_loss_forward.2}
  #allocation0 [shape = 'u32[]', space=smem, size = 0x4, offset = 0x4, fixed_abs, tag = 'smem constant byte address 0x4 - core index']
  #allocation1 [shape = 'u32[144,128]{1,0:T(1,128)}', space=vmem, size = 0x12000, scoped, tag = 'internal scratch']
  %s0 = inlined_call_operand.vmem [shape: f32[2,3,16,128], index: 0, kind: input, shape index: {}]
  %s1 = inlined_call_operand.vmem [shape: f32[3,19], index: 1, kind: input, shape index: {}]
  %s2 = inlined_call_operand.vmem [shape: f32[1,19], index: 2, kind: input, shape index: {}]
  %s3 = inlined_call_operand.vmem [shape: bf16[2,16,128], index: 3, kind: output, shape index: {}]
  %s4 = sld [smem:[#allocation0]]
  $region53: #{depth_loss_forward.2} parent=0
    _
  %s6 = ssub.s32 1, %s4
  %s7 = scalar_select 0, %s6, %s4
  $region1: #{depth_loss_forward.2} parent=0
    #allocation2 [shape = 'u8[2048]{0}', space=smem, size = 0x800, scoped, tag = 'input window, operand 1, single buffered']
    #allocation3 [shape = 's32[2]{0}', space=sflag, size = 0x8, scoped, tag = 'scoped memory for depth_loss_forward.2']
    #allocation4 [shape = 'u8[512]{0}', space=smem, size = 0x200, scoped, tag = 'input window, operand 2, single buffered']
    #allocation5 [shape = 's32[1]{0}', space=sflag, size = 0x4, scoped, tag = 'scoped memory for depth_loss_forward.2']
    %8 = vsyncpa [#allocation3], 0
    %9 = vsyncpa [#allocation5], 0
    loop: start=0, step=1, limit=4
    $region2: #{depth_loss_forward.2} parent=1 // loop_pre_header
      _
    $region3: #{depth_loss_forward.2} parent=1 // loop_header
      %s11 = sphi 0, %s15
      %p12 = scmp.ge.s32.totalorder %s11, 4
      %s18 = sphi 0, %s30
      %s19 = sphi 0, %s26
      %s20 = sphi 0, %s18
      %s21 = sphi 0, %s19
      %s22 = sphi 0, %s20
      %s23 = sphi 0, %s21
      %s35 = sphi 0, %s37
      %s38 = sphi 0, %s35
      %s39 = sphi 0, %s38
      %s55 = sphi 0, %s39
      %s59 = sphi 0, %s59
      %s61 = sphi 0, %s59
      %s62 = sphi 0, %s61
      %s76 = sphi 0, %s62
      %s80 = sphi 0, %s80
      %s82 = sphi 0, %s80
      %s83 = sphi 0, %s82
      %s97 = sphi 0, %s83
      %s105 = sphi 0, %s107
      %s108 = sphi 0, %s105
      %s109 = sphi 0, %s108
      %s125 = sphi 0, %s109
    $region4: #{depth_loss_forward.2} parent=1 // loop_header_branch
      %14 = sbr.rel (%p12) target = $region8
    $region5: #{depth_loss_forward.2} parent=1 // loop_body
      %s16 = ssub.s32 %s11, 1
      %s17 = ssub.s32 %s11, 2
      %s24 = sadd.s32 1, %s19
      %p25 = scmp.ge.s32.totalorder %s24, 1
      %s26 = scalar_select %p25, 0, %s24
      %s27 = sadd.s32 1, %s18
      %s28 = scalar_select %p25, %s27, %s18
      %p29 = scmp.ge.s32.totalorder %s28, 2
      %s30 = scalar_select %p29, 0, %s28
      %s31 = ssub.s32 %s18, %s30
      %s32 = ssub.s32 %s19, %s26
      %s33 = sor.u32 %s31, %s32
      %p34 = scmp.eq.s32.totalorder %s33, 0
      %s36 = sadd.s32 %s35, 1
      %s37 = scalar_select %p34, %s35, %s36
      %p40 = pneg %p34
      %p41 = scmp.eq.s32.totalorder %s11, 1
      %p42 = por %p40, %p41
      %p43 = scmp.ne.s32.totalorder %s35, %s38
      %p44 = scmp.eq.s32.totalorder %s11, 0
      %p45 = por %p43, %p44
      %p46 = scmp.ne.s32.totalorder %s35, %s38
      %p47 = scmp.eq.s32.totalorder %s16, 1
      %p48 = por %p46, %p47
      %p49 = scmp.ne.s32.totalorder %s38, %s39
      %p50 = scmp.eq.s32.totalorder %s16, 0
      %p51 = por %p49, %p50
      %p52 = scmp.ne.s32.totalorder %s38, %s39
      %p53 = scmp.eq.s32.totalorder %s17, 1
      %p54 = por %p52, %p53
      %p56 = scmp.ne.s32.totalorder %s39, %s55
      %p57 = scmp.eq.s32.totalorder %s17, 0
      %p58 = por %p56, %p57
      %s60 = sadd.s32 %s59, 1
      %p63 = scmp.eq.s32.totalorder %s11, 1
      %p64 = scmp.ne.s32.totalorder %s59, %s61
      %p65 = scmp.eq.s32.totalorder %s11, 0
      %p66 = por %p64, %p65
      %p67 = scmp.ne.s32.totalorder %s59, %s61
      %p68 = scmp.eq.s32.totalorder %s16, 1
      %p69 = por %p67, %p68
      %p70 = scmp.ne.s32.totalorder %s61, %s62
      %p71 = scmp.eq.s32.totalorder %s16, 0
      %p72 = por %p70, %p71
      %p73 = scmp.ne.s32.totalorder %s61, %s62
      %p74 = scmp.eq.s32.totalorder %s17, 1
      %p75 = por %p73, %p74
      %p77 = scmp.ne.s32.totalorder %s62, %s76
      %p78 = scmp.eq.s32.totalorder %s17, 0
      %p79 = por %p77, %p78
      %s81 = sadd.s32 %s80, 1
      %p84 = scmp.eq.s32.totalorder %s11, 1
      %p85 = scmp.ne.s32.totalorder %s80, %s82
      %p86 = scmp.eq.s32.totalorder %s11, 0
      %p87 = por %p85, %p86
      %p88 = scmp.ne.s32.totalorder %s80, %s82
      %p89 = scmp.eq.s32.totalorder %s16, 1
      %p90 = por %p88, %p89
      %p91 = scmp.ne.s32.totalorder %s82, %s83
      %p92 = scmp.eq.s32.totalorder %s16, 0
      %p93 = por %p91, %p92
      %p94 = scmp.ne.s32.totalorder %s82, %s83
      %p95 = scmp.eq.s32.totalorder %s17, 1
      %p96 = por %p94, %p95
      %p98 = scmp.ne.s32.totalorder %s83, %s97
      %p99 = scmp.eq.s32.totalorder %s17, 0
      %p100 = por %p98, %p99
      %s101 = ssub.s32 %s18, %s30
      %s102 = ssub.s32 %s19, %s26
      %s103 = sor.u32 %s101, %s102
      %p104 = scmp.eq.s32.totalorder %s103, 0
      %s106 = sadd.s32 %s105, 1
      %s107 = scalar_select %p104, %s105, %s106
      %p110 = pneg %p104
      %p111 = scmp.eq.s32.totalorder %s11, 1
      %p112 = por %p110, %p111
      %p113 = scmp.ne.s32.totalorder %s105, %s108
      %p114 = scmp.eq.s32.totalorder %s11, 0
      %p115 = por %p113, %p114
      %p116 = scmp.ne.s32.totalorder %s105, %s108
      %p117 = scmp.eq.s32.totalorder %s16, 1
      %p118 = por %p116, %p117
      %p119 = scmp.ne.s32.totalorder %s108, %s109
      %p120 = scmp.eq.s32.totalorder %s16, 0
      %p121 = por %p119, %p120
      %p122 = scmp.ne.s32.totalorder %s108, %s109
      %p123 = scmp.eq.s32.totalorder %s17, 1
      %p124 = por %p122, %p123
      %p126 = scmp.ne.s32.totalorder %s109, %s125
      %p127 = scmp.eq.s32.totalorder %s17, 0
      %p128 = por %p126, %p127
      %p129 = scmp.le.s32.totalorder 1, %s11
      %p130 = scmp.lt.s32.totalorder %s11, 3
      %p131 = pnand %p129, %p130
      %p132 = pneg %p131
      // Predicated region
      $region9: #{depth_loss_forward.2} parent=5 // pred_check
        _
      $region10: #{depth_loss_forward.2} parent=5 // pred_check_branch
        %134 = sbr.rel (%p131) target = $region12
      $region11: #{depth_loss_forward.2} parent=5 // pred_region
        %s135 = ssub.s32 %s11, 1
        // Predicated region
        $region13: #{depth_loss_forward.2} parent=11 // pred_check
          %p136 = pneg %p72
        $region14: #{depth_loss_forward.2} parent=11 // pred_check_branch
          %138 = sbr.rel (%p136) target = $region16
        $region15: #{depth_loss_forward.2} parent=11 // pred_region
          %s140 = ssub.s32 64, 64
          %141 = vsyncadd [#allocation3], %s140
          %s143 = sshll.u32 %s1, 4
          %s144 = int_to_ptr.vmem [resolvable:$true] %s143
          %146 = dma.vmem_to_smem %s144, 64, [#allocation2], [#allocation3]
        $region16: #{depth_loss_forward.2} parent=11 // pred_fallthru
          _
        // Predicated region
        $region17: #{depth_loss_forward.2} parent=11 // pred_check
          %p147 = pneg %p93
        $region18: #{depth_loss_forward.2} parent=11 // pred_check_branch
          %149 = sbr.rel (%p147) target = $region20
        $region19: #{depth_loss_forward.2} parent=11 // pred_region
          %s151 = ssub.s32 16, 16
          %152 = vsyncadd [#allocation5], %s151
          %s154 = sshll.u32 %s2, 4
          %s155 = int_to_ptr.vmem [resolvable:$true] %s154
          %157 = dma.vmem_to_smem %s155, 16, [#allocation4], [#allocation5]
        $region20: #{depth_loss_forward.2} parent=11 // pred_fallthru
          _
      $region12: #{depth_loss_forward.2} parent=5 // pred_fallthru
        _
      %p158 = scmp.lt.s32.totalorder %s11, 2
      // Predicated region
      $region21: #{depth_loss_forward.2} parent=5 // pred_check
        %p159 = pneg %p158
      $region22: #{depth_loss_forward.2} parent=5 // pred_check_branch
        %161 = sbr.rel (%p159) target = $region24
      $region23: #{depth_loss_forward.2} parent=5 // pred_region
        // Predicated region
        $region25: #{depth_loss_forward.2} parent=23 // pred_check
          %p162 = pneg %p45
        $region26: #{depth_loss_forward.2} parent=23 // pred_check_branch
          %164 = sbr.rel (%p162) target = $region28
        $region27: #{depth_loss_forward.2} parent=23 // pred_region
          %s165 = smul.u32 2, %s19
          %p166 = scmp.lt.s32.totalorder %s18, 1
          %s167 = scalar_select %p166, %s18, 1
          %p168 = scmp.lt.s32.totalorder %s165, 1
          %s169 = scalar_select %p168, %s165, 1
          %s170 = smul.addr %s167, 6
          %s171 = sadd.s32 %s169, %s170
          %s172 = smul.addr %s171, 8
          %s173 = scalar_lea.vmem %s0, %s172
          %s174 = smul.u32 2, %s19
        $region28: #{depth_loss_forward.2} parent=23 // pred_fallthru
          _
      $region24: #{depth_loss_forward.2} parent=5 // pred_fallthru
        _
      %p175 = scmp.le.s32.totalorder 1, %s11
      %p176 = scmp.lt.s32.totalorder %s11, 3
      %p177 = pnand %p175, %p176
      %p178 = pneg %p177
      // Predicated region
      $region29: #{depth_loss_forward.2} parent=5 // pred_check
        _
      $region30: #{depth_loss_forward.2} parent=5 // pred_check_branch
        %180 = sbr.rel (%p177) target = $region32
      $region31: #{depth_loss_forward.2} parent=5 // pred_region
        %s181 = ssub.s32 %s11, 1
        // Predicated region
        $region33: #{depth_loss_forward.2} parent=31 // pred_check
          %p182 = pneg %p72
        $region34: #{depth_loss_forward.2} parent=31 // pred_check_branch
          %184 = sbr.rel (%p182) target = $region36
        $region35: #{depth_loss_forward.2} parent=31 // pred_region
          %185 = dma.done [#allocation3], 64
        $region36: #{depth_loss_forward.2} parent=31 // pred_fallthru
          _
        // Predicated region
        $region37: #{depth_loss_forward.2} parent=31 // pred_check
          %p186 = pneg %p93
        $region38: #{depth_loss_forward.2} parent=31 // pred_check_branch
          %188 = sbr.rel (%p186) target = $region40
        $region39: #{depth_loss_forward.2} parent=31 // pred_region
          %189 = dma.done [#allocation5], 16
        $region40: #{depth_loss_forward.2} parent=31 // pred_fallthru
          _
        %190 = sfence
        %s191 = smul.u32 2, %s21
        %p192 = scmp.lt.s32.totalorder %s20, 1
        %s193 = scalar_select %p192, %s20, 1
        %p194 = scmp.lt.s32.totalorder %s191, 1
        %s195 = scalar_select %p194, %s191, 1
        %s196 = smul.addr %s193, 6
        %s197 = sadd.s32 %s195, %s196
        %s198 = smul.addr %s197, 8
        %s199 = scalar_lea.vmem %s0, %s198
        %p200 = pneg %p51
        %p201 = pneg %p48
        %p202 = pneg %p72
        %p203 = pneg %p69
        %p204 = pneg %p93
        %p205 = pneg %p90
        %p206 = pneg %p121
        %p207 = pneg %p118
        %s208 = smul.u32 2, %s21
        %p209 = scmp.lt.s32.totalorder %s20, 1
        %s210 = scalar_select %p209, %s20, 1
        %p211 = scmp.lt.s32.totalorder %s208, 1
        %s212 = scalar_select %p211, %s208, 1
        %s213 = smul.addr %s210, 2
        %s214 = sadd.s32 %s212, %s213
        %s215 = smul.addr %s214, 4
        %s216 = scalar_lea.vmem %s3, %s215
        %s217 = smul.u32 2, %s21
        %p218 = scmp.lt.s32.totalorder %s20, 1
        %s219 = scalar_select %p218, %s20, 1
        %p220 = scmp.lt.s32.totalorder %s217, 1
        %s221 = scalar_select %p220, %s217, 1
        %s222 = smul.addr %s219, 6
        %s223 = sadd.s32 %s221, %s222
        %s224 = smul.addr %s223, 8
        %s225 = scalar_lea.vmem %s0, %s224
        %s226 = smul.u32 2, %s21
        %s227 = smul.u32 2, %s21
        %p228 = scmp.lt.s32.totalorder %s20, 1
        %s229 = scalar_select %p228, %s20, 1
        %p230 = scmp.lt.s32.totalorder %s227, 1
        %s231 = scalar_select %p230, %s227, 1
        %s232 = smul.addr %s229, 2
        %s233 = sadd.s32 %s231, %s232
        %s234 = smul.addr %s233, 4
        %s235 = scalar_lea.vmem %s3, %s234
        %s236 = smul.u32 2, %s21
        %v237 = vld [vmem:[%s225] sm:$0xff]
        %v238 = vld [vmem:[%s225 + $0x8] sm:$0xff]
        %v239 = vld [vmem:[%s225 + $0x10] sm:$0xff]
        %v240 = vld [vmem:[%s225 + $0x18] sm:$0xff]
        %v241 = vld [vmem:[%s225 + $0x20] sm:$0xff]
        %v242 = vld [vmem:[%s225 + $0x28] sm:$0xff]
        %s243 = sld [smem:[#allocation2]]
        %v244 = vstv %s243
        %v245 = vmul.f32 %v237, %v244
        %v246 = vmul.f32 %v238, %v244
        %s247 = sld [smem:[#allocation2 + $0x80]]
        %v248 = vstv %s247
        %v249 = vmul.f32 %v239, %v248
        %v250 = vmul.f32 %v240, %v248
        %v251 = vadd.f32 %v245, %v249
        %v252 = vadd.f32 %v246, %v250
        %s253 = sld [smem:[#allocation2 + $0x100]]
        %v254 = vstv %s253
        %v255 = vmul.f32 %v241, %v254
        %v256 = vmul.f32 %v242, %v254
        %v257 = vadd.f32 %v251, %v255
        %v258 = vadd.f32 %v252, %v256
        %s259 = sld [smem:[#allocation4]]
        %v260 = vstv %s259
        %v261 = vadd.f32 %v257, %v260
        %v262 = vadd.f32 %v258, %v260
        %s263 = sld [smem:[#allocation2 + $0x1]]
        %v264 = vstv %s263
        %v265 = vmul.f32 %v237, %v264
        %v266 = vmul.f32 %v238, %v264
        %s267 = sld [smem:[#allocation2 + $0x81]]
        %v268 = vstv %s267
        %v269 = vmul.f32 %v239, %v268
        %v270 = vmul.f32 %v240, %v268
        %v271 = vadd.f32 %v265, %v269
        %v272 = vadd.f32 %v266, %v270
        %s273 = sld [smem:[#allocation2 + $0x101]]
        %v274 = vstv %s273
        %v275 = vmul.f32 %v241, %v274
        %v276 = vmul.f32 %v242, %v274
        %v277 = vadd.f32 %v271, %v275
        %v278 = vadd.f32 %v272, %v276
        %s279 = sld [smem:[#allocation4 + $0x1]]
        %v280 = vstv %s279
        %v281 = vadd.f32 %v277, %v280
        %v282 = vadd.f32 %v278, %v280
        %s283 = sld [smem:[#allocation2 + $0x2]]
        %v284 = vstv %s283
        %v285 = vmul.f32 %v237, %v284
        %v286 = vmul.f32 %v238, %v284
        %s287 = sld [smem:[#allocation2 + $0x82]]
        %v288 = vstv %s287
        %v289 = vmul.f32 %v239, %v288
        %v290 = vmul.f32 %v240, %v288
        %v291 = vadd.f32 %v285, %v289
        %v292 = vadd.f32 %v286, %v290
        %s293 = sld [smem:[#allocation2 + $0x102]]
        %v294 = vstv %s293
        %v295 = vmul.f32 %v241, %v294
        %v296 = vmul.f32 %v242, %v294
        %v297 = vadd.f32 %v291, %v295
        %v298 = vadd.f32 %v292, %v296
        %s299 = sld [smem:[#allocation4 + $0x2]]
        %v300 = vstv %s299
        %v301 = vadd.f32 %v297, %v300
        %v302 = vadd.f32 %v298, %v300
        %v303 = vmax.f32 %v281, %v301
        %v304 = vmax.f32 %v282, %v302
        %s305 = sld [smem:[#allocation2 + $0x3]]
        %v306 = vstv %s305
        %v307 = vmul.f32 %v237, %v306
        %v308 = vmul.f32 %v238, %v306
        %s309 = sld [smem:[#allocation2 + $0x83]]
        %v310 = vstv %s309
        %v311 = vmul.f32 %v239, %v310
        %v312 = vmul.f32 %v240, %v310
        %v313 = vadd.f32 %v307, %v311
        %v314 = vadd.f32 %v308, %v312
        %s315 = sld [smem:[#allocation2 + $0x103]]
        %v316 = vstv %s315
        %v317 = vmul.f32 %v241, %v316
        %v318 = vmul.f32 %v242, %v316
        %v319 = vadd.f32 %v313, %v317
        %v320 = vadd.f32 %v314, %v318
        %s321 = sld [smem:[#allocation4 + $0x3]]
        %v322 = vstv %s321
        %v323 = vadd.f32 %v319, %v322
        %v324 = vadd.f32 %v320, %v322
        %v325 = vmax.f32 %v303, %v323
        %v326 = vmax.f32 %v304, %v324
        %s327 = sld [smem:[#allocation2 + $0x4]]
        %v328 = vstv %s327
        %v329 = vmul.f32 %v237, %v328
        %v330 = vmul.f32 %v238, %v328
        %s331 = sld [smem:[#allocation2 + $0x84]]
        %v332 = vstv %s331
        %v333 = vmul.f32 %v239, %v332
        %v334 = vmul.f32 %v240, %v332
        %v335 = vadd.f32 %v329, %v333
        %v336 = vadd.f32 %v330, %v334
        %s337 = sld [smem:[#allocation2 + $0x104]]
        %v338 = vstv %s337
        %v339 = vmul.f32 %v241, %v338
        %v340 = vmul.f32 %v242, %v338
        %v341 = vadd.f32 %v335, %v339
        %v342 = vadd.f32 %v336, %v340
        %s343 = sld [smem:[#allocation4 + $0x4]]
        %v344 = vstv %s343
        %v345 = vadd.f32 %v341, %v344
        %v346 = vadd.f32 %v342, %v344
        %v347 = vmax.f32 %v325, %v345
        %v348 = vmax.f32 %v326, %v346
        %s349 = sld [smem:[#allocation2 + $0x5]]
        %v350 = vstv %s349
        %v351 = vmul.f32 %v237, %v350
        %v352 = vmul.f32 %v238, %v350
        %s353 = sld [smem:[#allocation2 + $0x85]]
        %v354 = vstv %s353
        %v355 = vmul.f32 %v239, %v354
        %v356 = vmul.f32 %v240, %v354
        %v357 = vadd.f32 %v351, %v355
        %v358 = vadd.f32 %v352, %v356
        %s359 = sld [smem:[#allocation2 + $0x105]]
        %v360 = vstv %s359
        %v361 = vmul.f32 %v241, %v360
        %v362 = vmul.f32 %v242, %v360
        %v363 = vadd.f32 %v357, %v361
        %v364 = vadd.f32 %v358, %v362
        %s365 = sld [smem:[#allocation4 + $0x5]]
        %v366 = vstv %s365
        %v367 = vadd.f32 %v363, %v366
        %v368 = vadd.f32 %v364, %v366
        %v369 = vmax.f32 %v347, %v367
        %v370 = vmax.f32 %v348, %v368
        %s371 = sld [smem:[#allocation2 + $0x6]]
        %v372 = vstv %s371
        %v373 = vmul.f32 %v237, %v372
        %v374 = vmul.f32 %v238, %v372
        %s375 = sld [smem:[#allocation2 + $0x86]]
        %v376 = vstv %s375
        %v377 = vmul.f32 %v239, %v376
        %v378 = vmul.f32 %v240, %v376
        %v379 = vadd.f32 %v373, %v377
        %v380 = vadd.f32 %v374, %v378
        %s381 = sld [smem:[#allocation2 + $0x106]]
        %v382 = vstv %s381
        %v383 = vmul.f32 %v241, %v382
        %v384 = vmul.f32 %v242, %v382
        %v385 = vadd.f32 %v379, %v383
        %v386 = vadd.f32 %v380, %v384
        %s387 = sld [smem:[#allocation4 + $0x6]]
        %v388 = vstv %s387
        %v389 = vadd.f32 %v385, %v388
        %v390 = vadd.f32 %v386, %v388
        %v391 = vmax.f32 %v369, %v389
        %v392 = vmax.f32 %v370, %v390
        %s393 = sld [smem:[#allocation2 + $0x7]]
        %v394 = vstv %s393
        %v395 = vmul.f32 %v237, %v394
        %v396 = vmul.f32 %v238, %v394
        %s397 = sld [smem:[#allocation2 + $0x87]]
        %v398 = vstv %s397
        %v399 = vmul.f32 %v239, %v398
        %v400 = vmul.f32 %v240, %v398
        %v401 = vadd.f32 %v395, %v399
        %v402 = vadd.f32 %v396, %v400
        %s403 = sld [smem:[#allocation2 + $0x107]]
        %v404 = vstv %s403
        %v405 = vmul.f32 %v241, %v404
        %v406 = vmul.f32 %v242, %v404
        %v407 = vadd.f32 %v401, %v405
        %v408 = vadd.f32 %v402, %v406
        %s409 = sld [smem:[#allocation4 + $0x7]]
        %v410 = vstv %s409
        %v411 = vadd.f32 %v407, %v410
        %v412 = vadd.f32 %v408, %v410
        %v413 = vmax.f32 %v391, %v411
        %v414 = vmax.f32 %v392, %v412
        %s415 = sld [smem:[#allocation2 + $0x8]]
        %v416 = vstv %s415
        %v417 = vmul.f32 %v237, %v416
        %v418 = vmul.f32 %v238, %v416
        %s419 = sld [smem:[#allocation2 + $0x88]]
        %v420 = vstv %s419
        %v421 = vmul.f32 %v239, %v420
        %v422 = vmul.f32 %v240, %v420
        %v423 = vadd.f32 %v417, %v421
        %v424 = vadd.f32 %v418, %v422
        %s425 = sld [smem:[#allocation2 + $0x108]]
        %v426 = vstv %s425
        %v427 = vmul.f32 %v241, %v426
        %v428 = vmul.f32 %v242, %v426
        %v429 = vadd.f32 %v423, %v427
        %v430 = vadd.f32 %v424, %v428
        %s431 = sld [smem:[#allocation4 + $0x8]]
        %v432 = vstv %s431
        %v433 = vadd.f32 %v429, %v432
        %v434 = vadd.f32 %v430, %v432
        %v435 = vmax.f32 %v413, %v433
        %v436 = vmax.f32 %v414, %v434
        %s437 = sld [smem:[#allocation2 + $0x9]]
        %v438 = vstv %s437
        %v439 = vmul.f32 %v237, %v438
        %v440 = vmul.f32 %v238, %v438
        %s441 = sld [smem:[#allocation2 + $0x89]]
        %v442 = vstv %s441
        %v443 = vmul.f32 %v239, %v442
        %v444 = vmul.f32 %v240, %v442
        %v445 = vadd.f32 %v439, %v443
        %v446 = vadd.f32 %v440, %v444
        %s447 = sld [smem:[#allocation2 + $0x109]]
        %v448 = vstv %s447
        %v449 = vmul.f32 %v241, %v448
        %v450 = vmul.f32 %v242, %v448
        %v451 = vadd.f32 %v445, %v449
        %v452 = vadd.f32 %v446, %v450
        %s453 = sld [smem:[#allocation4 + $0x9]]
        %v454 = vstv %s453
        %v455 = vadd.f32 %v451, %v454
        %v456 = vadd.f32 %v452, %v454
        %v457 = vmax.f32 %v435, %v455
        %v458 = vmax.f32 %v436, %v456
        %s459 = sld [smem:[#allocation2 + $0xa]]
        %v460 = vstv %s459
        %v461 = vmul.f32 %v237, %v460
        %v462 = vmul.f32 %v238, %v460
        %s463 = sld [smem:[#allocation2 + $0x8a]]
        %v464 = vstv %s463
        %v465 = vmul.f32 %v239, %v464
        %v466 = vmul.f32 %v240, %v464
        %v467 = vadd.f32 %v461, %v465
        %v468 = vadd.f32 %v462, %v466
        %s469 = sld [smem:[#allocation2 + $0x10a]]
        %v470 = vstv %s469
        %v471 = vmul.f32 %v241, %v470
        %v472 = vmul.f32 %v242, %v470
        %v473 = vadd.f32 %v467, %v471
        %v474 = vadd.f32 %v468, %v472
        %s475 = sld [smem:[#allocation4 + $0xa]]
        %v476 = vstv %s475
        %v477 = vadd.f32 %v473, %v476
        %v478 = vadd.f32 %v474, %v476
        %v479 = vmax.f32 %v457, %v477
        %v480 = vmax.f32 %v458, %v478
        %s481 = sld [smem:[#allocation2 + $0xb]]
        %v482 = vstv %s481
        %v483 = vmul.f32 %v237, %v482
        %v484 = vmul.f32 %v238, %v482
        %s485 = sld [smem:[#allocation2 + $0x8b]]
        %v486 = vstv %s485
        %v487 = vmul.f32 %v239, %v486
        %v488 = vmul.f32 %v240, %v486
        %v489 = vadd.f32 %v483, %v487
        %v490 = vadd.f32 %v484, %v488
        %s491 = sld [smem:[#allocation2 + $0x10b]]
        %v492 = vstv %s491
        %v493 = vmul.f32 %v241, %v492
        %v494 = vmul.f32 %v242, %v492
        %v495 = vadd.f32 %v489, %v493
        %v496 = vadd.f32 %v490, %v494
        %s497 = sld [smem:[#allocation4 + $0xb]]
        %v498 = vstv %s497
        %v499 = vadd.f32 %v495, %v498
        %v500 = vadd.f32 %v496, %v498
        %v501 = vmax.f32 %v479, %v499
        %v502 = vmax.f32 %v480, %v500
        %s503 = sld [smem:[#allocation2 + $0xc]]
        %v504 = vstv %s503
        %v505 = vmul.f32 %v237, %v504
        %v506 = vmul.f32 %v238, %v504
        %s507 = sld [smem:[#allocation2 + $0x8c]]
        %v508 = vstv %s507
        %v509 = vmul.f32 %v239, %v508
        %v510 = vmul.f32 %v240, %v508
        %v511 = vadd.f32 %v505, %v509
        %v512 = vadd.f32 %v506, %v510
        %s513 = sld [smem:[#allocation2 + $0x10c]]
        %v514 = vstv %s513
        %v515 = vmul.f32 %v241, %v514
        %v516 = vmul.f32 %v242, %v514
        %v517 = vadd.f32 %v511, %v515
        %v518 = vadd.f32 %v512, %v516
        %s519 = sld [smem:[#allocation4 + $0xc]]
        %v520 = vstv %s519
        %v521 = vadd.f32 %v517, %v520
        %v522 = vadd.f32 %v518, %v520
        %v523 = vmax.f32 %v501, %v521
        %v524 = vmax.f32 %v502, %v522
        %s525 = sld [smem:[#allocation2 + $0xd]]
        %v526 = vstv %s525
        %v527 = vmul.f32 %v237, %v526
        %v528 = vmul.f32 %v238, %v526
        %s529 = sld [smem:[#allocation2 + $0x8d]]
        %v530 = vstv %s529
        %v531 = vmul.f32 %v239, %v530
        %v532 = vmul.f32 %v240, %v530
        %v533 = vadd.f32 %v527, %v531
        %v534 = vadd.f32 %v528, %v532
        %s535 = sld [smem:[#allocation2 + $0x10d]]
        %v536 = vstv %s535
        %v537 = vmul.f32 %v241, %v536
        %v538 = vmul.f32 %v242, %v536
        %v539 = vadd.f32 %v533, %v537
        %v540 = vadd.f32 %v534, %v538
        %s541 = sld [smem:[#allocation4 + $0xd]]
        %v542 = vstv %s541
        %v543 = vadd.f32 %v539, %v542
        %v544 = vadd.f32 %v540, %v542
        %v545 = vmax.f32 %v523, %v543
        %v546 = vmax.f32 %v524, %v544
        %s547 = sld [smem:[#allocation2 + $0xe]]
        %v548 = vstv %s547
        %v549 = vmul.f32 %v237, %v548
        %v550 = vmul.f32 %v238, %v548
        %s551 = sld [smem:[#allocation2 + $0x8e]]
        %v552 = vstv %s551
        %v553 = vmul.f32 %v239, %v552
        %v554 = vmul.f32 %v240, %v552
        %v555 = vadd.f32 %v549, %v553
        %v556 = vadd.f32 %v550, %v554
        %s557 = sld [smem:[#allocation2 + $0x10e]]
        %v558 = vstv %s557
        %v559 = vmul.f32 %v241, %v558
        %v560 = vmul.f32 %v242, %v558
        %v561 = vadd.f32 %v555, %v559
        %v562 = vadd.f32 %v556, %v560
        %s563 = sld [smem:[#allocation4 + $0xe]]
        %v564 = vstv %s563
        %v565 = vadd.f32 %v561, %v564
        %v566 = vadd.f32 %v562, %v564
        %v567 = vmax.f32 %v545, %v565
        %v568 = vmax.f32 %v546, %v566
        %s569 = sld [smem:[#allocation2 + $0xf]]
        %v570 = vstv %s569
        %v571 = vmul.f32 %v237, %v570
        %v572 = vmul.f32 %v238, %v570
        %s573 = sld [smem:[#allocation2 + $0x8f]]
        %v574 = vstv %s573
        %v575 = vmul.f32 %v239, %v574
        %v576 = vmul.f32 %v240, %v574
        %v577 = vadd.f32 %v571, %v575
        %v578 = vadd.f32 %v572, %v576
        %s579 = sld [smem:[#allocation2 + $0x10f]]
        %v580 = vstv %s579
        %v581 = vmul.f32 %v241, %v580
        %v582 = vmul.f32 %v242, %v580
        %v583 = vadd.f32 %v577, %v581
        %v584 = vadd.f32 %v578, %v582
        %s585 = sld [smem:[#allocation4 + $0xf]]
        %v586 = vstv %s585
        %v587 = vadd.f32 %v583, %v586
        %v588 = vadd.f32 %v584, %v586
        %v589 = vmax.f32 %v567, %v587
        %v590 = vmax.f32 %v568, %v588
        %s591 = sld [smem:[#allocation2 + $0x10]]
        %v592 = vstv %s591
        %v593 = vmul.f32 %v237, %v592
        %v594 = vmul.f32 %v238, %v592
        %s595 = sld [smem:[#allocation2 + $0x90]]
        %v596 = vstv %s595
        %v597 = vmul.f32 %v239, %v596
        %v598 = vmul.f32 %v240, %v596
        %v599 = vadd.f32 %v593, %v597
        %v600 = vadd.f32 %v594, %v598
        %s601 = sld [smem:[#allocation2 + $0x110]]
        %v602 = vstv %s601
        %v603 = vmul.f32 %v241, %v602
        %v604 = vmul.f32 %v242, %v602
        %v605 = vadd.f32 %v599, %v603
        %v606 = vadd.f32 %v600, %v604
        %s607 = sld [smem:[#allocation4 + $0x10]]
        %v608 = vstv %s607
        %v609 = vadd.f32 %v605, %v608
        %v610 = vadd.f32 %v606, %v608
        %v611 = vmax.f32 %v589, %v609
        %v612 = vmax.f32 %v590, %v610
        %s613 = sld [smem:[#allocation2 + $0x11]]
        %v614 = vstv %s613
        %v615 = vmul.f32 %v237, %v614
        %v616 = vmul.f32 %v238, %v614
        %s617 = sld [smem:[#allocation2 + $0x91]]
        %v618 = vstv %s617
        %v619 = vmul.f32 %v239, %v618
        %v620 = vmul.f32 %v240, %v618
        %v621 = vadd.f32 %v615, %v619
        %v622 = vadd.f32 %v616, %v620
        %s623 = sld [smem:[#allocation2 + $0x111]]
        %v624 = vstv %s623
        %v625 = vmul.f32 %v241, %v624
        %v626 = vmul.f32 %v242, %v624
        %v627 = vadd.f32 %v621, %v625
        %v628 = vadd.f32 %v622, %v626
        %s629 = sld [smem:[#allocation4 + $0x11]]
        %v630 = vstv %s629
        %v631 = vadd.f32 %v627, %v630
        %v632 = vadd.f32 %v628, %v630
        %v633 = vmax.f32 %v611, %v631
        %v634 = vmax.f32 %v612, %v632
        %s635 = sld [smem:[#allocation2 + $0x12]]
        %v636 = vstv %s635
        %v637 = vmul.f32 %v237, %v636
        %v638 = vmul.f32 %v238, %v636
        %s639 = sld [smem:[#allocation2 + $0x92]]
        %v640 = vstv %s639
        %v641 = vmul.f32 %v239, %v640
        %v642 = vmul.f32 %v240, %v640
        %v643 = vadd.f32 %v637, %v641
        %v644 = vadd.f32 %v638, %v642
        %s645 = sld [smem:[#allocation2 + $0x112]]
        %v646 = vstv %s645
        %v647 = vmul.f32 %v241, %v646
        %v648 = vmul.f32 %v242, %v646
        %v649 = vadd.f32 %v643, %v647
        %v650 = vadd.f32 %v644, %v648
        %s651 = sld [smem:[#allocation4 + $0x12]]
        %v652 = vstv %s651
        %v653 = vadd.f32 %v649, %v652
        %v654 = vadd.f32 %v650, %v652
        %v655 = vmax.f32 %v633, %v653
        %v656 = vmax.f32 %v634, %v654
        %vm657 = vcmp.gt.f32.partialorder %v655, %v261
        %vm658 = vcmp.gt.f32.partialorder %v656, %v262
        %v659 = vsel %vm657, 1, 0
        %v660 = vsel %vm658, 1, 0
        %v661 = vcvt.s32.f32 %v659
        %v662 = vcvt.s32.f32 %v660
        %v663 = vpack.c.bf16 %v662, %v661
        %v665 = vunpack.c.l.b16 %v663
        %v666 = vunpack.c.h.b16 %v663
        %v667 = vpack.c.b16 %v665, %v665
        %v668 = vpack.c.b16 %v666, %v666
        %671 = vst [vmem:[%s235] sm:$0xf] %v667
        %672 = vst [vmem:[%s235 + $0x4] sm:$0xf] %v668
        %s673 = smul.u32 2, %s21
        %p674 = scmp.lt.s32.totalorder %s20, 1
        %s675 = scalar_select %p674, %s20, 1
        %p676 = scmp.lt.s32.totalorder %s673, 1
        %s677 = scalar_select %p676, %s673, 1
        %s678 = smul.addr %s675, 2
        %s679 = sadd.s32 %s677, %s678
        %s680 = smul.addr %s679, 4
        %s681 = scalar_lea.vmem %s3, %s680
        // Predicated region
        $region41: #{depth_loss_forward.2} parent=31 // pred_check
          %p682 = pneg %p118
        $region42: #{depth_loss_forward.2} parent=31 // pred_check_branch
          %684 = sbr.rel (%p682) target = $region44
        $region43: #{depth_loss_forward.2} parent=31 // pred_region
          %s685 = smul.u32 2, %s21
        $region44: #{depth_loss_forward.2} parent=31 // pred_fallthru
          _
      $region32: #{depth_loss_forward.2} parent=5 // pred_fallthru
        _
      %p686 = scmp.le.s32.totalorder 2, %s11
      // Predicated region
      $region45: #{depth_loss_forward.2} parent=5 // pred_check
        %p687 = pneg %p686
      $region46: #{depth_loss_forward.2} parent=5 // pred_check_branch
        %689 = sbr.rel (%p687) target = $region48
      $region47: #{depth_loss_forward.2} parent=5 // pred_region
        %s690 = ssub.s32 %s11, 2
        // Predicated region
        $region49: #{depth_loss_forward.2} parent=47 // pred_check
          %p691 = pneg %p124
        $region50: #{depth_loss_forward.2} parent=47 // pred_check_branch
          %693 = sbr.rel (%p691) target = $region52
        $region51: #{depth_loss_forward.2} parent=47 // pred_region
          %s694 = smul.u32 2, %s23
          %p695 = scmp.lt.s32.totalorder %s22, 1
          %s696 = scalar_select %p695, %s22, 1
          %p697 = scmp.lt.s32.totalorder %s694, 1
          %s698 = scalar_select %p697, %s694, 1
          %s699 = smul.addr %s696, 2
          %s700 = sadd.s32 %s698, %s699
          %s701 = smul.addr %s700, 4
          %s702 = scalar_lea.vmem %s3, %s701
        $region52: #{depth_loss_forward.2} parent=47 // pred_fallthru
          _
      $region48: #{depth_loss_forward.2} parent=5 // pred_fallthru
        _
    $region6: #{depth_loss_forward.2} parent=1 // loop_footer
      %s15 = sadd.s32 1, %s11
    $region7: #{depth_loss_forward.2} parent=1 // loop_footer_branch
      %10 = sbr.rel target = $region3
    $region8: #{depth_loss_forward.2} parent=1 // loop_exit
      _
    %703 = vsyncpa [#allocation3], 1
    %s704 = scalar_lea.sflag [#allocation3], 1
    %705 = vsyncpa %s704, 1
    %706 = vsyncpa [#allocation5], 1

// kernel: depth_loss_forward.3
$region0: #{depth_loss_forward.3}
  #allocation0 [shape = 'u32[]', space=smem, size = 0x4, offset = 0x4, fixed_abs, tag = 'smem constant byte address 0x4 - core index']
  #allocation1 [shape = 'u32[144,128]{1,0:T(1,128)}', space=vmem, size = 0x12000, scoped, tag = 'internal scratch']
  #allocation2 [shape = 'f32[16,128]{1,0:T(8,128)}', space=vmem, size = 0x2000, scoped, tag = 'scratch operand']
  %s0 = inlined_call_operand.vmem [shape: f32[2,1,16,128], index: 0, kind: input, shape index: {}]
  %s1 = inlined_call_operand.vmem [shape: bf16[2,1,16,128], index: 1, kind: input, shape index: {}]
  %s2 = inlined_call_operand.hbm [shape: f32[1,1], index: 2, kind: output, shape index: {}]
  %s3 = sld [smem:[#allocation0]]
  $region49: #{depth_loss_forward.3} parent=0
    _
  %s5 = ssub.s32 1, %s3
  %s6 = scalar_select 0, %s5, %s3
  $region1: #{depth_loss_forward.3} parent=0
    #allocation3 [shape = 'u8[512]{0}', space=vmem, size = 0x400, scoped, tag = 'output window, operand 0, single buffered']
    #allocation4 [shape = 's32[2]{0}', space=sflag, size = 0x8, scoped, tag = 'scoped memory for depth_loss_forward.3']
    %7 = vsyncpa [#allocation4], 0
    loop: start=0, step=1, limit=4
    $region2: #{depth_loss_forward.3} parent=1 // loop_pre_header
      _
    $region3: #{depth_loss_forward.3} parent=1 // loop_header
      %s9 = sphi 0, %s13
      %p10 = scmp.ge.s32.totalorder %s9, 4
      %s16 = sphi 0, %s28
      %s17 = sphi 0, %s24
      %s18 = sphi 0, %s16
      %s19 = sphi 0, %s17
      %s20 = sphi 0, %s18
      %s21 = sphi 0, %s19
      %s33 = sphi 0, %s35
      %s36 = sphi 0, %s33
      %s37 = sphi 0, %s36
      %s53 = sphi 0, %s37
      %s61 = sphi 0, %s63
      %s64 = sphi 0, %s61
      %s65 = sphi 0, %s64
      %s81 = sphi 0, %s65
      %s85 = sphi 0, %s85
      %s87 = sphi 0, %s85
      %s88 = sphi 0, %s87
      %s102 = sphi 0, %s88
    $region4: #{depth_loss_forward.3} parent=1 // loop_header_branch
      %12 = sbr.rel (%p10) target = $region8
    $region5: #{depth_loss_forward.3} parent=1 // loop_body
      %s14 = ssub.s32 %s9, 1
      %s15 = ssub.s32 %s9, 2
      %s22 = sadd.s32 1, %s17
      %p23 = scmp.ge.s32.totalorder %s22, 1
      %s24 = scalar_select %p23, 0, %s22
      %s25 = sadd.s32 1, %s16
      %s26 = scalar_select %p23, %s25, %s16
      %p27 = scmp.ge.s32.totalorder %s26, 2
      %s28 = scalar_select %p27, 0, %s26
      %s29 = ssub.s32 %s16, %s28
      %s30 = ssub.s32 %s17, %s24
      %s31 = sor.u32 %s29, %s30
      %p32 = scmp.eq.s32.totalorder %s31, 0
      %s34 = sadd.s32 %s33, 1
      %s35 = scalar_select %p32, %s33, %s34
      %p38 = pneg %p32
      %p39 = scmp.eq.s32.totalorder %s9, 1
      %p40 = por %p38, %p39
      %p41 = scmp.ne.s32.totalorder %s33, %s36
      %p42 = scmp.eq.s32.totalorder %s9, 0
      %p43 = por %p41, %p42
      %p44 = scmp.ne.s32.totalorder %s33, %s36
      %p45 = scmp.eq.s32.totalorder %s14, 1
      %p46 = por %p44, %p45
      %p47 = scmp.ne.s32.totalorder %s36, %s37
      %p48 = scmp.eq.s32.totalorder %s14, 0
      %p49 = por %p47, %p48
      %p50 = scmp.ne.s32.totalorder %s36, %s37
      %p51 = scmp.eq.s32.totalorder %s15, 1
      %p52 = por %p50, %p51
      %p54 = scmp.ne.s32.totalorder %s37, %s53
      %p55 = scmp.eq.s32.totalorder %s15, 0
      %p56 = por %p54, %p55
      %s57 = ssub.s32 %s16, %s28
      %s58 = ssub.s32 %s17, %s24
      %s59 = sor.u32 %s57, %s58
      %p60 = scmp.eq.s32.totalorder %s59, 0
      %s62 = sadd.s32 %s61, 1
      %s63 = scalar_select %p60, %s61, %s62
      %p66 = pneg %p60
      %p67 = scmp.eq.s32.totalorder %s9, 1
      %p68 = por %p66, %p67
      %p69 = scmp.ne.s32.totalorder %s61, %s64
      %p70 = scmp.eq.s32.totalorder %s9, 0
      %p71 = por %p69, %p70
      %p72 = scmp.ne.s32.totalorder %s61, %s64
      %p73 = scmp.eq.s32.totalorder %s14, 1
      %p74 = por %p72, %p73
      %p75 = scmp.ne.s32.totalorder %s64, %s65
      %p76 = scmp.eq.s32.totalorder %s14, 0
      %p77 = por %p75, %p76
      %p78 = scmp.ne.s32.totalorder %s64, %s65
      %p79 = scmp.eq.s32.totalorder %s15, 1
      %p80 = por %p78, %p79
      %p82 = scmp.ne.s32.totalorder %s65, %s81
      %p83 = scmp.eq.s32.totalorder %s15, 0
      %p84 = por %p82, %p83
      %s86 = sadd.s32 %s85, 1
      %p89 = scmp.eq.s32.totalorder %s9, 1
      %p90 = scmp.ne.s32.totalorder %s85, %s87
      %p91 = scmp.eq.s32.totalorder %s9, 0
      %p92 = por %p90, %p91
      %p93 = scmp.ne.s32.totalorder %s85, %s87
      %p94 = scmp.eq.s32.totalorder %s14, 1
      %p95 = por %p93, %p94
      %p96 = scmp.ne.s32.totalorder %s87, %s88
      %p97 = scmp.eq.s32.totalorder %s14, 0
      %p98 = por %p96, %p97
      %p99 = scmp.ne.s32.totalorder %s87, %s88
      %p100 = scmp.eq.s32.totalorder %s15, 1
      %p101 = por %p99, %p100
      %p103 = scmp.ne.s32.totalorder %s88, %s102
      %p104 = scmp.eq.s32.totalorder %s15, 0
      %p105 = por %p103, %p104
      %p106 = scmp.le.s32.totalorder 1, %s9
      %p107 = scmp.lt.s32.totalorder %s9, 3
      %p108 = pnand %p106, %p107
      %p109 = pneg %p108
      // Predicated region
      $region9: #{depth_loss_forward.3} parent=5 // pred_check
        _
      $region10: #{depth_loss_forward.3} parent=5 // pred_check_branch
        %111 = sbr.rel (%p108) target = $region12
      $region11: #{depth_loss_forward.3} parent=5 // pred_region
        %s112 = ssub.s32 %s9, 1
      $region12: #{depth_loss_forward.3} parent=5 // pred_fallthru
        _
      %p113 = scmp.lt.s32.totalorder %s9, 2
      // Predicated region
      $region13: #{depth_loss_forward.3} parent=5 // pred_check
        %p114 = pneg %p113
      $region14: #{depth_loss_forward.3} parent=5 // pred_check_branch
        %116 = sbr.rel (%p114) target = $region16
      $region15: #{depth_loss_forward.3} parent=5 // pred_region
        // Predicated region
        $region17: #{depth_loss_forward.3} parent=15 // pred_check
          %p117 = pneg %p43
        $region18: #{depth_loss_forward.3} parent=15 // pred_check_branch
          %119 = sbr.rel (%p117) target = $region20
        $region19: #{depth_loss_forward.3} parent=15 // pred_region
          %s120 = smul.u32 2, %s17
          %p121 = scmp.lt.s32.totalorder %s16, 1
          %s122 = scalar_select %p121, %s16, 1
          %p123 = scmp.lt.s32.totalorder %s120, 1
          %s124 = scalar_select %p123, %s120, 1
          %s125 = smul.addr %s122, 2
          %s126 = sadd.s32 %s124, %s125
          %s127 = smul.addr %s126, 8
          %s128 = scalar_lea.vmem %s0, %s127
          %s129 = smul.u32 2, %s17
        $region20: #{depth_loss_forward.3} parent=15 // pred_fallthru
          _
        // Predicated region
        $region21: #{depth_loss_forward.3} parent=15 // pred_check
          %p130 = pneg %p71
        $region22: #{depth_loss_forward.3} parent=15 // pred_check_branch
          %132 = sbr.rel (%p130) target = $region24
        $region23: #{depth_loss_forward.3} parent=15 // pred_region
          %s133 = smul.u32 2, %s17
          %p134 = scmp.lt.s32.totalorder %s16, 1
          %s135 = scalar_select %p134, %s16, 1
          %p136 = scmp.lt.s32.totalorder %s133, 1
          %s137 = scalar_select %p136, %s133, 1
          %s138 = smul.addr %s135, 2
          %s139 = sadd.s32 %s137, %s138
          %s140 = smul.addr %s139, 4
          %s141 = scalar_lea.vmem %s1, %s140
          %s142 = smul.u32 2, %s17
        $region24: #{depth_loss_forward.3} parent=15 // pred_fallthru
          _
      $region16: #{depth_loss_forward.3} parent=5 // pred_fallthru
        _
      %p143 = scmp.le.s32.totalorder 1, %s9
      %p144 = scmp.lt.s32.totalorder %s9, 3
      %p145 = pnand %p143, %p144
      %p146 = pneg %p145
      // Predicated region
      $region25: #{depth_loss_forward.3} parent=5 // pred_check
        _
      $region26: #{depth_loss_forward.3} parent=5 // pred_check_branch
        %148 = sbr.rel (%p145) target = $region28
      $region27: #{depth_loss_forward.3} parent=5 // pred_region
        %s149 = ssub.s32 %s9, 1
        %s150 = smul.u32 2, %s19
        %p151 = scmp.lt.s32.totalorder %s18, 1
        %s152 = scalar_select %p151, %s18, 1
        %p153 = scmp.lt.s32.totalorder %s150, 1
        %s154 = scalar_select %p153, %s150, 1
        %s155 = smul.addr %s152, 2
        %s156 = sadd.s32 %s154, %s155
        %s157 = smul.addr %s156, 8
        %s158 = scalar_lea.vmem %s0, %s157
        %p159 = pneg %p49
        %p160 = pneg %p46
        %s161 = smul.u32 2, %s19
        %p162 = scmp.lt.s32.totalorder %s18, 1
        %s163 = scalar_select %p162, %s18, 1
        %p164 = scmp.lt.s32.totalorder %s161, 1
        %s165 = scalar_select %p164, %s161, 1
        %s166 = smul.addr %s163, 2
        %s167 = sadd.s32 %s165, %s166
        %s168 = smul.addr %s167, 4
        %s169 = scalar_lea.vmem %s1, %s168
        %p170 = pneg %p77
        %p171 = pneg %p74
        %p172 = pneg %p98
        %p173 = pneg %p95
        %s174 = smul.u32 2, %s19
        %p175 = scmp.lt.s32.totalorder %s18, 1
        %s176 = scalar_select %p175, %s18, 1
        %p177 = scmp.lt.s32.totalorder %s174, 1
        %s178 = scalar_select %p177, %s174, 1
        %s179 = smul.addr %s176, 2
        %s180 = sadd.s32 %s178, %s179
        %s181 = smul.addr %s180, 8
        %s182 = scalar_lea.vmem %s0, %s181
        %s183 = smul.u32 2, %s19
        %s184 = smul.u32 2, %s19
        %p185 = scmp.lt.s32.totalorder %s18, 1
        %s186 = scalar_select %p185, %s18, 1
        %p187 = scmp.lt.s32.totalorder %s184, 1
        %s188 = scalar_select %p187, %s184, 1
        %s189 = smul.addr %s186, 2
        %s190 = sadd.s32 %s188, %s189
        %s191 = smul.addr %s190, 4
        %s192 = scalar_lea.vmem %s1, %s191
        %s193 = smul.u32 2, %s19
        %p194 = scmp.eq.s32.totalorder %s18, 0
        %p195 = scmp.eq.s32.totalorder %s19, 0
        %p196 = pnand %p194, %p195
        %p197 = pneg %p196
        // Predicated region
        $region29: #{depth_loss_forward.3} parent=27 // pred_check
          _
        $region30: #{depth_loss_forward.3} parent=27 // pred_check_branch
          %199 = sbr.rel (%p196) target = $region32
        $region31: #{depth_loss_forward.3} parent=27 // pred_region
          %200 = vst [vmem:[#allocation2] sm:$0xff] 0.0
          %201 = vst [vmem:[#allocation2 + $0x8] sm:$0xff] 0.0
        $region32: #{depth_loss_forward.3} parent=27 // pred_fallthru
          _
        %v202 = vld [vmem:[%s192] sm:$0xf]
        %v203 = vld [vmem:[%s192 + $0x4] sm:$0xf]
        %v204 = vunpack.c.l.bf16 %v202
        %v205 = vunpack.c.l.bf16 %v203
        %v206 = vsub.f32 1.0, %v204
        %v207 = vsub.f32 1.0, %v205
        %v208 = vld [vmem:[%s182] sm:$0xff]
        %v209 = vld [vmem:[%s182 + $0x8] sm:$0xff]
        %v210 = vsub.f32 %v208, 2.7729
        %v211 = vsub.f32 %v209, 2.7729
        %v212 = vmul.f32 %v210, %v206
        %v213 = vmul.f32 %v211, %v207
        %v214 = vld [vmem:[#allocation2] sm:$0xff]
        %v215 = vld [vmem:[#allocation2 + $0x8] sm:$0xff]
        %v216 = vmul.f32 %v212, %v212
        %v217 = vmul.f32 %v213, %v213
        %v218 = vadd.f32 %v216, 0.0
        %v219 = vadd.f32 %v217, 0.0
        %v220 = vadd.f32 %v214, %v218
        %v221 = vadd.f32 %v215, %v219
        %222 = vst [vmem:[#allocation2] sm:$0xff] %v220
        %223 = vst [vmem:[#allocation2 + $0x8] sm:$0xff] %v221
        %p224 = scmp.eq.s32.totalorder %s18, 1
        %p225 = pnand %p224, %p195
        %p226 = pneg %p225
        // Predicated region
        $region33: #{depth_loss_forward.3} parent=27 // pred_check
          _
        $region34: #{depth_loss_forward.3} parent=27 // pred_check_branch
          %228 = sbr.rel (%p225) target = $region36
        $region35: #{depth_loss_forward.3} parent=27 // pred_region
          %v229 = vld [vmem:[#allocation2] sm:$0xff]
          %v230 = vld [vmem:[#allocation2 + $0x8] sm:$0xff]
          %v231 = vadd.f32 %v229, %v230
          %232 = vadd.xlane.f32.xlu0 %v231
          %v233 = vpop.xlane.xlu0 %232
          %v234 = vrot.slane %v233, 4
          %v235 = vadd.f32 %v233, %v234
          %v236 = vrot.slane %v235, 2
          %v237 = vadd.f32 %v235, %v236
          %v238 = vrot.slane %v237, 1
          %v239 = vadd.f32 %v237, %v238
          %s240 = vtos %v239
          %s241 = smul.f32 %s240, 0.00048828125
          %v242 = vstv %s241
          %vm243 = vcmask 0
          %244 = vst.msk [vmem:[#allocation3] sm:$0x1] %vm243, %v242
        $region36: #{depth_loss_forward.3} parent=27 // pred_fallthru
          _
        // Predicated region
        $region37: #{depth_loss_forward.3} parent=27 // pred_check
          %p245 = pneg %p95
        $region38: #{depth_loss_forward.3} parent=27 // pred_check_branch
          %247 = sbr.rel (%p245) target = $region40
        $region39: #{depth_loss_forward.3} parent=27 // pred_region
          %s249 = ssub.s32 16, 16
          %250 = vsyncadd [#allocation4], %s249
          %s252 = sshll.u32 [#allocation3], 4
          %s253 = int_to_ptr.vmem [resolvable:$true] %s252
          %255 = dma.vmem_to_hbm [thread:$0]  %s253, 16, %s2, [#allocation4]
        $region40: #{depth_loss_forward.3} parent=27 // pred_fallthru
          _
        // Predicated region
        $region41: #{depth_loss_forward.3} parent=27 // pred_check
          %p256 = pneg %p95
        $region42: #{depth_loss_forward.3} parent=27 // pred_check_branch
          %258 = sbr.rel (%p256) target = $region44
        $region43: #{depth_loss_forward.3} parent=27 // pred_region
          %259 = dma.done [#allocation4], 16
        $region44: #{depth_loss_forward.3} parent=27 // pred_fallthru
          _
      $region28: #{depth_loss_forward.3} parent=5 // pred_fallthru
        _
      %p260 = scmp.le.s32.totalorder 2, %s9
      // Predicated region
      $region45: #{depth_loss_forward.3} parent=5 // pred_check
        %p261 = pneg %p260
      $region46: #{depth_loss_forward.3} parent=5 // pred_check_branch
        %263 = sbr.rel (%p261) target = $region48
      $region47: #{depth_loss_forward.3} parent=5 // pred_region
        %s264 = ssub.s32 %s9, 2
      $region48: #{depth_loss_forward.3} parent=5 // pred_fallthru
        _
    $region6: #{depth_loss_forward.3} parent=1 // loop_footer
      %s13 = sadd.s32 1, %s9
    $region7: #{depth_loss_forward.3} parent=1 // loop_footer_branch
      %8 = sbr.rel target = $region3
    $region8: #{depth_loss_forward.3} parent=1 // loop_exit
      _
    %265 = vsyncpa [#allocation4], 1
    %s266 = scalar_lea.sflag [#allocation4], 1
    %267 = vsyncpa %s266, 1

</llo_original>
